<compile_context>
chip_gen: v6e
topology: v6e:2x2x1
jax: 0.10.0
libtpu: 0.0.40
codegen_flags: <defaults>
</compile_context>

<pallas_src>
from functools import partial

import numpy as np
import jax
import jax.numpy as jnp
from jax.experimental import pallas as pl
from jax.experimental.pallas import tpu as pltpu


# ----------------------------- config ---------------------------------------
KERNEL_SIZES = (3, 4, 5)   # config.kernel_sizes (fc expects exactly 3 branches)
EMBED_DIM    = 32          # config.embed_dim
NUM_CHANNEL  = 1           # config.num_channel (single channel is unsqueezed)
NUM_KERNEL   = 8           # config.num_kernel
NUM_CLASS    = 4           # config.num_class
DROPOUT_P    = 0.5         # config.dropout (identity at inference)
VOCAB_SIZE   = 50
SEQ_LEN      = 16
BATCH        = 2

N_PAD   = 128              # lane-dense width for conv columns / fc output
FC_ROWS = 32               # 3*C = 24 concat features, padded to 32 for the FC
K_MAX   = max(KERNEL_SIZES)


def _round_up(x, m):
    return (x + m - 1) // m * m


# ----------------------------- kernel ---------------------------------------
def _textcnn_kernel(ids_ref, tslab_ref, bcat_ref, mask_ref, fcw_ref, fcb_ref,
                    out_ref, *, k_max, v_pad, batch_pad, seq_len):
    """Fused (folded-embedding) conv + ReLU + masked max-pool + FC.

    ids_ref  : (k_max*B_pad*S, 1) i32   row dk*bs + r = flat token id at r+dk
    tslab_ref: (k_max*v_pad, 128) bf16  per-tap folded tables T_dk = emb @ W_tap^T
    bcat_ref : (1, 128) f32             conv biases at branch column blocks
    mask_ref : (S, 128) f32             0/1 time-validity mask per branch column
    fcw_ref  : (32, 128) f32            fc weight (rows 0:3C, cols 0:num_class used)
    fcb_ref  : (1, 128) f32             fc bias
    out_ref  : (B_pad, 128) f32         lane-dense logits slab (full-tile store)
    """
    bs = batch_pad * seq_len
    n_pad = out_ref.shape[1]
    fc_rows = fcw_ref.shape[0]

    # One-hot of the tap-shifted ids (0/1 is exact in bf16).  Each tap is one
    # lane-dense (bs, v_pad) x (v_pad, n_pad) bf16 MXU matmul accumulated in f32
    # registers: no VMEM scratch, no embedding matmul, no masked partial stores.
    vocab_iota = jax.lax.broadcasted_iota(jnp.int32, (bs, v_pad), 1)
    acc = None
    for dk in range(k_max):
        onehot = (ids_ref[dk * bs:(dk + 1) * bs, :] == vocab_iota).astype(jnp.bfloat16)
        part = jnp.dot(onehot, tslab_ref[dk * v_pad:(dk + 1) * v_pad, :],
                       preferred_element_type=jnp.float32)
        acc = part if acc is None else acc + part

    # Bias + ReLU, then zero invalid time steps / pad columns with the
    # precomputed 0/1 mask (ReLU >= 0 so 0 is a neutral fill for the max).
    y = jnp.maximum(acc + bcat_ref[...], 0.0)                     # (bs, n_pad)
    y3 = y.reshape(batch_pad, seq_len, n_pad) * mask_ref[...]     # (B_pad, S, n_pad)
    pooled = jnp.max(y3, axis=1)                                  # (B_pad, n_pad)

    # FC (dropout = identity at inference); tiny (B_pad,32)x(32,128) f32 matmul,
    # full-tile (8,128) store.
    out_ref[...] = jnp.dot(pooled[:, :fc_rows], fcw_ref[...],
                           preferred_element_type=jnp.float32) + fcb_ref[...]


# ----------------------------- one-time parameter packing --------------------
def prepare_params(params, seq_len):
    """Host-side (numpy) one-time packing of model params into kernel layouts.

    Hoisted out of the per-call forward path: the embedding is folded into
    per-tap tables T_dk[v, i*C+c] = sum_e emb[v,e] * W_i[c,dk,e] (zero columns
    for dk >= k_i), so the kernel never touches the raw embedding/conv weights.
    """
    emb = np.asarray(params["embedding"], np.float32)               # (V, E)
    V, E = emb.shape
    v_pad = _round_up(V, 128)
    C = int(np.asarray(params["conv_w"][0]).shape[0])
    n_feat = len(KERNEL_SIZES) * C
    num_class = int(np.asarray(params["fc_w"]).shape[0])
    assert len(KERNEL_SIZES) == 3 and n_feat <= FC_ROWS and num_class <= N_PAD
    assert seq_len >= K_MAX, "seq_len must cover the largest conv kernel"

    emb_pad = np.zeros((v_pad, E), np.float32)
    emb_pad[:V] = emb

    tslab = np.zeros((K_MAX * v_pad, N_PAD), np.float32)
    bcat = np.zeros((1, N_PAD), np.float32)
    for i, k in enumerate(KERNEL_SIZES):
        w = np.asarray(params["conv_w"][i], np.float32)[:, 0, :, :]  # (C, k, E)
        for dk in range(k):     # dk >= k leaves zero columns (correctness invariant)
            tslab[dk * v_pad:(dk + 1) * v_pad, i * C:(i + 1) * C] = \
                emb_pad @ w[:, dk, :].T
        bcat[0, i * C:(i + 1) * C] = np.asarray(params["conv_b"][i], np.float32)

    # Static time-validity mask: branch i valid for t < S - k_i + 1; pad cols 0.
    mask = np.zeros((seq_len, N_PAD), np.float32)
    for i, k in enumerate(KERNEL_SIZES):
        mask[:seq_len - k + 1, i * C:(i + 1) * C] = 1.0

    fcw = np.zeros((FC_ROWS, N_PAD), np.float32)
    fcw[:n_feat, :num_class] = np.asarray(params["fc_w"], np.float32).T
    fcb = np.zeros((1, N_PAD), np.float32)
    fcb[0, :num_class] = np.asarray(params["fc_b"], np.float32)

    return {
        "tslab": jnp.asarray(tslab, dtype=jnp.bfloat16),   # bf16 MXU operand
        "bcat":  jnp.asarray(bcat),
        "mask":  jnp.asarray(mask),
        "fcw":   jnp.asarray(fcw),
        "fcb":   jnp.asarray(fcb),
        "num_class": num_class,
    }


# ----------------------------- forward ---------------------------------------
@jax.jit
def _forward_slab(token_ids, tslab, bcat, mask, fcw, fcb):
    """token_ids: (S, B) int ids (PyTorch seq-major). Returns (B_pad, 128) slab."""
    S, B = token_ids.shape
    v_pad = tslab.shape[0] // K_MAX
    n_pad = tslab.shape[1]
    b_pad = _round_up(B, 8)                 # full sublane tile for the output store
    bs = b_pad * S

    # Tap-shifted token ids (tiny int plumbing; the only token-dependent prep).
    # Reads that cross a batch boundary / the zero tail land only in positions
    # that the time-validity mask zeroes out.
    ids = jnp.zeros((b_pad, S), jnp.int32).at[:B].set(token_ids.T.astype(jnp.int32))
    ids_flat = jnp.concatenate([ids.reshape(-1), jnp.zeros((K_MAX - 1,), jnp.int32)])
    ids_taps = jnp.stack([ids_flat[dk:dk + bs] for dk in range(K_MAX)], axis=0)
    ids_taps = ids_taps.reshape(K_MAX * bs, 1)

    kernel = partial(_textcnn_kernel, k_max=K_MAX, v_pad=v_pad,
                     batch_pad=b_pad, seq_len=S)

    # NOTE(v7x scaling): single no-grid invocation is fine at this size (<~300 KiB
    # live).  If BATCH/SEQ/VOCAB grow, add a batch-tile grid with
    # dimension_semantics=("parallel",) so both v7x TensorCores are used and
    # re-derive block sizes for v7x's 64 MiB VMEM.
    return pl.pallas_call(
        kernel,
        out_shape=jax.ShapeDtypeStruct((b_pad, n_pad), jnp.float32),
        in_specs=[pl.BlockSpec(memory_space=pltpu.MemorySpace.VMEM)] * 6,
        out_specs=pl.BlockSpec(memory_space=pltpu.MemorySpace.VMEM),
    )(ids_taps, tslab, bcat, mask, fcw, fcb)


def textcnn_forward(token_ids, packed):
    """token_ids: (S, B) int ids. Returns (B, num_class) logits."""
    assert packed["mask"].shape[0] == token_ids.shape[0], "packed for different seq_len"
    slab = _forward_slab(token_ids, packed["tslab"], packed["bcat"], packed["mask"],
                         packed["fcw"], packed["fcb"])
    return slab[:token_ids.shape[1], :packed["num_class"]]   # drop batch/lane padding


# ----------------------------- reference (pure JAX) --------------------------
def textcnn_reference(token_ids, params):
    emb = params["embedding"]
    xe = jnp.transpose(emb[token_ids], (1, 0, 2)).astype(jnp.float32)  # (B, S, E)
    B, S, E = xe.shape
    feats = []
    for i, k in enumerate(KERNEL_SIZES):
        w = params["conv_w"][i][:, 0, :, :]          # (C, k, E)
        b = params["conv_b"][i]                      # (C,)
        t = S - k + 1
        windows = jnp.stack([xe[:, dk:dk + t, :] for dk in range(k)], axis=2)  # (B,T,k,E)
        scores = jnp.einsum("btke,cke->btc", windows, w) + b                   # (B,T,C)
        feats.append(jnp.max(jax.nn.relu(scores), axis=1))                     # (B,C)
    x = jnp.concatenate(feats, axis=1)               # (B, 3C)
    return x @ params["fc_w"].T + params["fc_b"]     # dropout is identity in eval


# ----------------------------- main ------------------------------------------
if __name__ == "__main__":
    key = jax.random.PRNGKey(0)
    ks = jax.random.split(key, 2 + 2 * len(KERNEL_SIZES) + 3)

    params = {
        "embedding": 0.1 * jax.random.normal(ks[0], (VOCAB_SIZE, EMBED_DIM), jnp.float32),
        "conv_w": [0.1 * jax.random.normal(ks[1 + i],
                                           (NUM_KERNEL, NUM_CHANNEL, k, EMBED_DIM),
                                           jnp.float32)
                   for i, k in enumerate(KERNEL_SIZES)],
        "conv_b": [0.1 * jax.random.normal(ks[4 + i], (NUM_KERNEL,), jnp.float32)
                   for i in range(len(KERNEL_SIZES))],
        "fc_w": 0.1 * jax.random.normal(ks[7], (NUM_CLASS, NUM_KERNEL * 3), jnp.float32),
        "fc_b": 0.1 * jax.random.normal(ks[8], (NUM_CLASS,), jnp.float32),
    }
    token_ids = jax.random.randint(ks[9], (SEQ_LEN, BATCH), 0, VOCAB_SIZE, dtype=jnp.int32)

    packed = prepare_params(params, seq_len=SEQ_LEN)      # one-time packing (hoisted)

    logits = jax.block_until_ready(textcnn_forward(token_ids, packed))
    ref = jax.block_until_ready(textcnn_reference(token_ids, params))

    assert logits.shape == (BATCH, NUM_CLASS), logits.shape
    # Tolerance relaxed vs pure-f32: the folded tables are bf16 MXU operands
    # (accumulation stays f32); observed error is well below these bounds.
    np.testing.assert_allclose(np.asarray(logits), np.asarray(ref), rtol=5e-3, atol=1e-3)
    print("KERNEL_OK")
</pallas_src>

<mosaic_0001>
module attributes {stable_mosaic.version = 11 : i64} {
  func.func @_textcnn_kernel(%arg0: memref<640x1xi32, #tpu.memory_space<vmem>>, %arg1: memref<640x128xbf16, #tpu.memory_space<vmem>>, %arg2: memref<1x128xf32, #tpu.memory_space<vmem>>, %arg3: memref<16x128xf32, #tpu.memory_space<vmem>>, %arg4: memref<32x128xf32, #tpu.memory_space<vmem>>, %arg5: memref<1x128xf32, #tpu.memory_space<vmem>>, %arg6: memref<8x128xf32, #tpu.memory_space<vmem>>) attributes {dimension_semantics = [], scalar_prefetch = 0 : i64, scratch_operands = 0 : i64, tpu.core_type = #tpu.core_type<tc>} {
    %0 = tpu.iota {dimensions = array<i32: 1>} : vector<128x128xi32>
    %c0 = arith.constant 0 : index
    %c0_0 = arith.constant 0 : index
    %1 = vector.load %arg0[%c0, %c0_0] : memref<640x1xi32, #tpu.memory_space<vmem>>, vector<128x1xi32>
    %2 = vector.broadcast %1 : vector<128x1xi32> to vector<128x128xi32>
    %3 = arith.cmpi eq, %2, %0 : vector<128x128xi32>
    %4 = arith.extui %3 : vector<128x128xi1> to vector<128x128xi32>
    %5 = arith.sitofp %4 : vector<128x128xi32> to vector<128x128xf32>
    %6 = arith.truncf %5 : vector<128x128xf32> to vector<128x128xbf16>
    %c0_1 = arith.constant 0 : index
    %c0_2 = arith.constant 0 : index
    %7 = vector.load %arg1[%c0_1, %c0_2] : memref<640x128xbf16, #tpu.memory_space<vmem>>, vector<128x128xbf16>
    %cst = arith.constant dense<0.000000e+00> : vector<128x128xf32>
    %8 = tpu.matmul %6, %7, %cst {dimension_numbers = #tpu.dot_dimension_numbers<[1], [0], [0], [1], [0, 0, 1, 1], [], []>} : vector<128x128xbf16>, vector<128x128xbf16>, vector<128x128xf32> -> vector<128x128xf32>
    %c128 = arith.constant 128 : index
    %c0_3 = arith.constant 0 : index
    %9 = vector.load %arg0[%c128, %c0_3] : memref<640x1xi32, #tpu.memory_space<vmem>>, vector<128x1xi32>
    %10 = vector.broadcast %9 : vector<128x1xi32> to vector<128x128xi32>
    %11 = arith.cmpi eq, %10, %0 : vector<128x128xi32>
    %12 = arith.extui %11 : vector<128x128xi1> to vector<128x128xi32>
    %13 = arith.sitofp %12 : vector<128x128xi32> to vector<128x128xf32>
    %14 = arith.truncf %13 : vector<128x128xf32> to vector<128x128xbf16>
    %c128_4 = arith.constant 128 : index
    %c0_5 = arith.constant 0 : index
    %15 = vector.load %arg1[%c128_4, %c0_5] : memref<640x128xbf16, #tpu.memory_space<vmem>>, vector<128x128xbf16>
    %cst_6 = arith.constant dense<0.000000e+00> : vector<128x128xf32>
    %16 = tpu.matmul %14, %15, %cst_6 {dimension_numbers = #tpu.dot_dimension_numbers<[1], [0], [0], [1], [0, 0, 1, 1], [], []>} : vector<128x128xbf16>, vector<128x128xbf16>, vector<128x128xf32> -> vector<128x128xf32>
    %17 = arith.addf %8, %16 : vector<128x128xf32>
    %c256 = arith.constant 256 : index
    %c0_7 = arith.constant 0 : index
    %18 = vector.load %arg0[%c256, %c0_7] : memref<640x1xi32, #tpu.memory_space<vmem>>, vector<128x1xi32>
    %19 = vector.broadcast %18 : vector<128x1xi32> to vector<128x128xi32>
    %20 = arith.cmpi eq, %19, %0 : vector<128x128xi32>
    %21 = arith.extui %20 : vector<128x128xi1> to vector<128x128xi32>
    %22 = arith.sitofp %21 : vector<128x128xi32> to vector<128x128xf32>
    %23 = arith.truncf %22 : vector<128x128xf32> to vector<128x128xbf16>
    %c256_8 = arith.constant 256 : index
    %c0_9 = arith.constant 0 : index
    %24 = vector.load %arg1[%c256_8, %c0_9] : memref<640x128xbf16, #tpu.memory_space<vmem>>, vector<128x128xbf16>
    %cst_10 = arith.constant dense<0.000000e+00> : vector<128x128xf32>
    %25 = tpu.matmul %23, %24, %cst_10 {dimension_numbers = #tpu.dot_dimension_numbers<[1], [0], [0], [1], [0, 0, 1, 1], [], []>} : vector<128x128xbf16>, vector<128x128xbf16>, vector<128x128xf32> -> vector<128x128xf32>
    %26 = arith.addf %17, %25 : vector<128x128xf32>
    %c384 = arith.constant 384 : index
    %c0_11 = arith.constant 0 : index
    %27 = vector.load %arg0[%c384, %c0_11] : memref<640x1xi32, #tpu.memory_space<vmem>>, vector<128x1xi32>
    %28 = vector.broadcast %27 : vector<128x1xi32> to vector<128x128xi32>
    %29 = arith.cmpi eq, %28, %0 : vector<128x128xi32>
    %30 = arith.extui %29 : vector<128x128xi1> to vector<128x128xi32>
    %31 = arith.sitofp %30 : vector<128x128xi32> to vector<128x128xf32>
    %32 = arith.truncf %31 : vector<128x128xf32> to vector<128x128xbf16>
    %c384_12 = arith.constant 384 : index
    %c0_13 = arith.constant 0 : index
    %33 = vector.load %arg1[%c384_12, %c0_13] : memref<640x128xbf16, #tpu.memory_space<vmem>>, vector<128x128xbf16>
    %cst_14 = arith.constant dense<0.000000e+00> : vector<128x128xf32>
    %34 = tpu.matmul %32, %33, %cst_14 {dimension_numbers = #tpu.dot_dimension_numbers<[1], [0], [0], [1], [0, 0, 1, 1], [], []>} : vector<128x128xbf16>, vector<128x128xbf16>, vector<128x128xf32> -> vector<128x128xf32>
    %35 = arith.addf %26, %34 : vector<128x128xf32>
    %c512 = arith.constant 512 : index
    %c0_15 = arith.constant 0 : index
    %36 = vector.load %arg0[%c512, %c0_15] : memref<640x1xi32, #tpu.memory_space<vmem>>, vector<128x1xi32>
    %37 = vector.broadcast %36 : vector<128x1xi32> to vector<128x128xi32>
    %38 = arith.cmpi eq, %37, %0 : vector<128x128xi32>
    %39 = arith.extui %38 : vector<128x128xi1> to vector<128x128xi32>
    %40 = arith.sitofp %39 : vector<128x128xi32> to vector<128x128xf32>
    %41 = arith.truncf %40 : vector<128x128xf32> to vector<128x128xbf16>
    %c512_16 = arith.constant 512 : index
    %c0_17 = arith.constant 0 : index
    %42 = vector.load %arg1[%c512_16, %c0_17] : memref<640x128xbf16, #tpu.memory_space<vmem>>, vector<128x128xbf16>
    %cst_18 = arith.constant dense<0.000000e+00> : vector<128x128xf32>
    %43 = tpu.matmul %41, %42, %cst_18 {dimension_numbers = #tpu.dot_dimension_numbers<[1], [0], [0], [1], [0, 0, 1, 1], [], []>} : vector<128x128xbf16>, vector<128x128xbf16>, vector<128x128xf32> -> vector<128x128xf32>
    %44 = arith.addf %35, %43 : vector<128x128xf32>
    %c0_19 = arith.constant 0 : index
    %c0_20 = arith.constant 0 : index
    %45 = vector.load %arg2[%c0_19, %c0_20] : memref<1x128xf32, #tpu.memory_space<vmem>>, vector<1x128xf32>
    %46 = vector.broadcast %45 : vector<1x128xf32> to vector<128x128xf32>
    %47 = arith.addf %44, %46 : vector<128x128xf32>
    %cst_21 = arith.constant 0.000000e+00 : f32
    %48 = vector.broadcast %cst_21 : f32 to vector<128x128xf32>
    %49 = arith.maximumf %47, %48 : vector<128x128xf32>
    %50 = vector.shape_cast %49 : vector<128x128xf32> to vector<8x16x128xf32>
    %c0_22 = arith.constant 0 : index
    %c0_23 = arith.constant 0 : index
    %51 = vector.load %arg3[%c0_22, %c0_23] : memref<16x128xf32, #tpu.memory_space<vmem>>, vector<16x128xf32>
    %52 = vector.shape_cast %51 : vector<16x128xf32> to vector<1x16x128xf32>
    %53 = vector.broadcast %52 : vector<1x16x128xf32> to vector<8x16x128xf32>
    %54 = arith.mulf %50, %53 : vector<8x16x128xf32>
    %cst_24 = arith.constant dense<0xFF800000> : vector<8x128xf32>
    %55 = vector.multi_reduction <maximumf>, %54, %cst_24 [1] : vector<8x16x128xf32> to vector<8x128xf32>
    %56 = vector.extract_strided_slice %55 {offsets = [0, 0], sizes = [8, 32], strides = [1, 1]} : vector<8x128xf32> to vector<8x32xf32>
    %c0_25 = arith.constant 0 : index
    %c0_26 = arith.constant 0 : index
    %57 = vector.load %arg4[%c0_25, %c0_26] : memref<32x128xf32, #tpu.memory_space<vmem>>, vector<32x128xf32>
    %cst_27 = arith.constant dense<0.000000e+00> : vector<8x128xf32>
    %58 = tpu.matmul %56, %57, %cst_27 {dimension_numbers = #tpu.dot_dimension_numbers<[1], [0], [0], [1], [0, 0, 1, 1], [], []>} : vector<8x32xf32>, vector<32x128xf32>, vector<8x128xf32> -> vector<8x128xf32>
    %c0_28 = arith.constant 0 : index
    %c0_29 = arith.constant 0 : index
    %59 = vector.load %arg5[%c0_28, %c0_29] : memref<1x128xf32, #tpu.memory_space<vmem>>, vector<1x128xf32>
    %60 = vector.broadcast %59 : vector<1x128xf32> to vector<8x128xf32>
    %61 = arith.addf %58, %60 : vector<8x128xf32>
    %c0_30 = arith.constant 0 : index
    %c0_31 = arith.constant 0 : index
    %62 = vector.load %arg6[%c0_30, %c0_31] : memref<8x128xf32, #tpu.memory_space<vmem>>, vector<8x128xf32>
    tpu.vector_store %arg6[%c0_30, %c0_31], %61 {strides = array<i32>} : memref<8x128xf32, #tpu.memory_space<vmem>>, vector<8x128xf32>,
    return
  }
}

</mosaic_0001>

<llo_original>
// kernel: _forward_slab.1
$region0: #{_forward_slab.1}
  #allocation0 [shape = 'u32[]', space=smem, size = 0x4, offset = 0x4, fixed_abs, tag = 'smem constant byte address 0x4 - core index']
  #allocation1 [shape = 'u32[144,128]{1,0:T(1,128)}', space=vmem, size = 0x12000, scoped, tag = 'internal scratch']
  %s0 = inlined_call_operand.vmem [shape: s32[640,1], index: 0, kind: input, shape index: {}]
  %s1 = inlined_call_operand.vmem [shape: bf16[640,128], index: 1, kind: input, shape index: {}]
  %s2 = inlined_call_operand.vmem [shape: f32[1,128], index: 2, kind: input, shape index: {}]
  %s3 = inlined_call_operand.vmem [shape: f32[16,128], index: 3, kind: input, shape index: {}]
  %s4 = inlined_call_operand.vmem [shape: f32[32,128], index: 4, kind: input, shape index: {}]
  %s5 = inlined_call_operand.vmem [shape: f32[1,128], index: 5, kind: input, shape index: {}]
  %s6 = inlined_call_operand.hbm [shape: f32[8,128], index: 6, kind: output, shape index: {}]
  %s7 = sld [smem:[#allocation0]]
  $region34: #{_forward_slab.1} parent=0
    _
  %s9 = ssub.s32 1, %s7
  %s10 = scalar_select 0, %s9, %s7
  $region1: #{_forward_slab.1} parent=0
    #allocation2 [shape = 'u8[4096]{0}', space=vmem, size = 0x1000, scoped, tag = 'output window, operand 0, single buffered']
    #allocation3 [shape = 's32[1]{0}', space=sflag, size = 0x4, scoped, tag = 'scoped memory for _forward_slab.1']
    %11 = vsyncpa [#allocation3], 0
    // Predicated region
    $region2: #{_forward_slab.1} parent=1 // pred_check
      _
    $region3: #{_forward_slab.1} parent=1 // pred_check_branch
      %13 = sbr.rel (0) target = $region5
    $region4: #{_forward_slab.1} parent=1 // pred_region
      _
    $region5: #{_forward_slab.1} parent=1 // pred_fallthru
      _
    // Predicated region
    $region6: #{_forward_slab.1} parent=1 // pred_check
      _
    $region7: #{_forward_slab.1} parent=1 // pred_check_branch
      %15 = sbr.rel (0) target = $region9
    $region8: #{_forward_slab.1} parent=1 // pred_region
      _
    $region9: #{_forward_slab.1} parent=1 // pred_fallthru
      _
    // Predicated region
    $region10: #{_forward_slab.1} parent=1 // pred_check
      _
    $region11: #{_forward_slab.1} parent=1 // pred_check_branch
      %17 = sbr.rel (0) target = $region13
    $region12: #{_forward_slab.1} parent=1 // pred_region
      _
    $region13: #{_forward_slab.1} parent=1 // pred_fallthru
      _
    // Predicated region
    $region14: #{_forward_slab.1} parent=1 // pred_check
      _
    $region15: #{_forward_slab.1} parent=1 // pred_check_branch
      %19 = sbr.rel (0) target = $region17
    $region16: #{_forward_slab.1} parent=1 // pred_region
      _
    $region17: #{_forward_slab.1} parent=1 // pred_fallthru
      _
    // Predicated region
    $region18: #{_forward_slab.1} parent=1 // pred_check
      _
    $region19: #{_forward_slab.1} parent=1 // pred_check_branch
      %21 = sbr.rel (0) target = $region21
    $region20: #{_forward_slab.1} parent=1 // pred_region
      _
    $region21: #{_forward_slab.1} parent=1 // pred_fallthru
      _
    // Predicated region
    $region22: #{_forward_slab.1} parent=1 // pred_check
      _
    $region23: #{_forward_slab.1} parent=1 // pred_check_branch
      %23 = sbr.rel (0) target = $region25
    $region24: #{_forward_slab.1} parent=1 // pred_region
      _
    $region25: #{_forward_slab.1} parent=1 // pred_fallthru
      _
    %v25 = vlaneseq
    %v26 = vand.u32 %v25, 127
    %v27 = vld [vmem:[%s0] sm:$0xff]
    %v28 = vld [vmem:[%s0 + $0x8] sm:$0xff]
    %v29 = vld [vmem:[%s0 + $0x10] sm:$0xff]
    %v30 = vld [vmem:[%s0 + $0x18] sm:$0xff]
    %v31 = vld [vmem:[%s0 + $0x20] sm:$0xff]
    %v32 = vld [vmem:[%s0 + $0x28] sm:$0xff]
    %v33 = vld [vmem:[%s0 + $0x30] sm:$0xff]
    %v34 = vld [vmem:[%s0 + $0x38] sm:$0xff]
    %v35 = vld [vmem:[%s0 + $0x40] sm:$0xff]
    %v36 = vld [vmem:[%s0 + $0x48] sm:$0xff]
    %v37 = vld [vmem:[%s0 + $0x50] sm:$0xff]
    %v38 = vld [vmem:[%s0 + $0x58] sm:$0xff]
    %v39 = vld [vmem:[%s0 + $0x60] sm:$0xff]
    %v40 = vld [vmem:[%s0 + $0x68] sm:$0xff]
    %v41 = vld [vmem:[%s0 + $0x70] sm:$0xff]
    %v42 = vld [vmem:[%s0 + $0x78] sm:$0xff]
    %43 = vset.pattern.permute.xlu0 0
    %44 = vperm.xlu0 %43, %v27
    %v45 = vpop.permute.xlu0 %44
    %46 = vset.pattern.permute.xlu0 0
    %47 = vperm.xlu0 %46, %v28
    %v48 = vpop.permute.xlu0 %47
    %49 = vset.pattern.permute.xlu0 0
    %50 = vperm.xlu0 %49, %v29
    %v51 = vpop.permute.xlu0 %50
    %52 = vset.pattern.permute.xlu0 0
    %53 = vperm.xlu0 %52, %v30
    %v54 = vpop.permute.xlu0 %53
    %55 = vset.pattern.permute.xlu0 0
    %56 = vperm.xlu0 %55, %v31
    %v57 = vpop.permute.xlu0 %56
    %58 = vset.pattern.permute.xlu0 0
    %59 = vperm.xlu0 %58, %v32
    %v60 = vpop.permute.xlu0 %59
    %61 = vset.pattern.permute.xlu0 0
    %62 = vperm.xlu0 %61, %v33
    %v63 = vpop.permute.xlu0 %62
    %64 = vset.pattern.permute.xlu0 0
    %65 = vperm.xlu0 %64, %v34
    %v66 = vpop.permute.xlu0 %65
    %67 = vset.pattern.permute.xlu0 0
    %68 = vperm.xlu0 %67, %v35
    %v69 = vpop.permute.xlu0 %68
    %70 = vset.pattern.permute.xlu0 0
    %71 = vperm.xlu0 %70, %v36
    %v72 = vpop.permute.xlu0 %71
    %73 = vset.pattern.permute.xlu0 0
    %74 = vperm.xlu0 %73, %v37
    %v75 = vpop.permute.xlu0 %74
    %76 = vset.pattern.permute.xlu0 0
    %77 = vperm.xlu0 %76, %v38
    %v78 = vpop.permute.xlu0 %77
    %79 = vset.pattern.permute.xlu0 0
    %80 = vperm.xlu0 %79, %v39
    %v81 = vpop.permute.xlu0 %80
    %82 = vset.pattern.permute.xlu0 0
    %83 = vperm.xlu0 %82, %v40
    %v84 = vpop.permute.xlu0 %83
    %85 = vset.pattern.permute.xlu0 0
    %86 = vperm.xlu0 %85, %v41
    %v87 = vpop.permute.xlu0 %86
    %88 = vset.pattern.permute.xlu0 0
    %89 = vperm.xlu0 %88, %v42
    %v90 = vpop.permute.xlu0 %89
    %vm91 = vcmp.eq.s32.totalorder %v45, %v26
    %vm92 = vcmp.eq.s32.totalorder %v48, %v26
    %vm93 = vcmp.eq.s32.totalorder %v51, %v26
    %vm94 = vcmp.eq.s32.totalorder %v54, %v26
    %vm95 = vcmp.eq.s32.totalorder %v57, %v26
    %vm96 = vcmp.eq.s32.totalorder %v60, %v26
    %vm97 = vcmp.eq.s32.totalorder %v63, %v26
    %vm98 = vcmp.eq.s32.totalorder %v66, %v26
    %vm99 = vcmp.eq.s32.totalorder %v69, %v26
    %vm100 = vcmp.eq.s32.totalorder %v72, %v26
    %vm101 = vcmp.eq.s32.totalorder %v75, %v26
    %vm102 = vcmp.eq.s32.totalorder %v78, %v26
    %vm103 = vcmp.eq.s32.totalorder %v81, %v26
    %vm104 = vcmp.eq.s32.totalorder %v84, %v26
    %vm105 = vcmp.eq.s32.totalorder %v87, %v26
    %vm106 = vcmp.eq.s32.totalorder %v90, %v26
    %v107 = vsel %vm91, 1, 0
    %v108 = vsel %vm92, 1, 0
    %v109 = vsel %vm93, 1, 0
    %v110 = vsel %vm94, 1, 0
    %v111 = vsel %vm95, 1, 0
    %v112 = vsel %vm96, 1, 0
    %v113 = vsel %vm97, 1, 0
    %v114 = vsel %vm98, 1, 0
    %v115 = vsel %vm99, 1, 0
    %v116 = vsel %vm100, 1, 0
    %v117 = vsel %vm101, 1, 0
    %v118 = vsel %vm102, 1, 0
    %v119 = vsel %vm103, 1, 0
    %v120 = vsel %vm104, 1, 0
    %v121 = vsel %vm105, 1, 0
    %v122 = vsel %vm106, 1, 0
    %v123 = vcvt.s32.f32 %v107
    %v124 = vcvt.s32.f32 %v108
    %v125 = vcvt.s32.f32 %v109
    %v126 = vcvt.s32.f32 %v110
    %v127 = vcvt.s32.f32 %v111
    %v128 = vcvt.s32.f32 %v112
    %v129 = vcvt.s32.f32 %v113
    %v130 = vcvt.s32.f32 %v114
    %v131 = vcvt.s32.f32 %v115
    %v132 = vcvt.s32.f32 %v116
    %v133 = vcvt.s32.f32 %v117
    %v134 = vcvt.s32.f32 %v118
    %v135 = vcvt.s32.f32 %v119
    %v136 = vcvt.s32.f32 %v120
    %v137 = vcvt.s32.f32 %v121
    %v138 = vcvt.s32.f32 %v122
    %v139 = vpack.c.bf16 %v124, %v123
    %v140 = vpack.c.bf16 %v126, %v125
    %v141 = vpack.c.bf16 %v128, %v127
    %v142 = vpack.c.bf16 %v130, %v129
    %v143 = vpack.c.bf16 %v132, %v131
    %v144 = vpack.c.bf16 %v134, %v133
    %v145 = vpack.c.bf16 %v136, %v135
    %v146 = vpack.c.bf16 %v138, %v137
    %v147 = vld [vmem:[%s1] sm:$0xf]
    %v148 = vld [vmem:[%s1 + $0x4] sm:$0xf]
    %v149 = vld [vmem:[%s1 + $0x8] sm:$0xf]
    %v150 = vld [vmem:[%s1 + $0xc] sm:$0xf]
    %v151 = vld [vmem:[%s1 + $0x10] sm:$0xf]
    %v152 = vld [vmem:[%s1 + $0x14] sm:$0xf]
    %v153 = vld [vmem:[%s1 + $0x18] sm:$0xf]
    %v154 = vld [vmem:[%s1 + $0x1c] sm:$0xf]
    %v155 = vld [vmem:[%s1 + $0x20] sm:$0xf]
    %v156 = vld [vmem:[%s1 + $0x24] sm:$0xf]
    %v157 = vld [vmem:[%s1 + $0x28] sm:$0xf]
    %v158 = vld [vmem:[%s1 + $0x2c] sm:$0xf]
    %v159 = vld [vmem:[%s1 + $0x30] sm:$0xf]
    %v160 = vld [vmem:[%s1 + $0x34] sm:$0xf]
    %v161 = vld [vmem:[%s1 + $0x38] sm:$0xf]
    %v162 = vld [vmem:[%s1 + $0x3c] sm:$0xf]
    %v163 = vld [vmem:[%s0 + $0x80] sm:$0xff]
    %v164 = vld [vmem:[%s0 + $0x88] sm:$0xff]
    %v165 = vld [vmem:[%s0 + $0x90] sm:$0xff]
    %v166 = vld [vmem:[%s0 + $0x98] sm:$0xff]
    %v167 = vld [vmem:[%s0 + $0xa0] sm:$0xff]
    %v168 = vld [vmem:[%s0 + $0xa8] sm:$0xff]
    %v169 = vld [vmem:[%s0 + $0xb0] sm:$0xff]
    %v170 = vld [vmem:[%s0 + $0xb8] sm:$0xff]
    %v171 = vld [vmem:[%s0 + $0xc0] sm:$0xff]
    %v172 = vld [vmem:[%s0 + $0xc8] sm:$0xff]
    %v173 = vld [vmem:[%s0 + $0xd0] sm:$0xff]
    %v174 = vld [vmem:[%s0 + $0xd8] sm:$0xff]
    %v175 = vld [vmem:[%s0 + $0xe0] sm:$0xff]
    %v176 = vld [vmem:[%s0 + $0xe8] sm:$0xff]
    %v177 = vld [vmem:[%s0 + $0xf0] sm:$0xff]
    %v178 = vld [vmem:[%s0 + $0xf8] sm:$0xff]
    %179 = vset.pattern.permute.xlu0 0
    %180 = vperm.xlu0 %179, %v163
    %v181 = vpop.permute.xlu0 %180
    %182 = vset.pattern.permute.xlu0 0
    %183 = vperm.xlu0 %182, %v164
    %v184 = vpop.permute.xlu0 %183
    %185 = vset.pattern.permute.xlu0 0
    %186 = vperm.xlu0 %185, %v165
    %v187 = vpop.permute.xlu0 %186
    %188 = vset.pattern.permute.xlu0 0
    %189 = vperm.xlu0 %188, %v166
    %v190 = vpop.permute.xlu0 %189
    %191 = vset.pattern.permute.xlu0 0
    %192 = vperm.xlu0 %191, %v167
    %v193 = vpop.permute.xlu0 %192
    %194 = vset.pattern.permute.xlu0 0
    %195 = vperm.xlu0 %194, %v168
    %v196 = vpop.permute.xlu0 %195
    %197 = vset.pattern.permute.xlu0 0
    %198 = vperm.xlu0 %197, %v169
    %v199 = vpop.permute.xlu0 %198
    %200 = vset.pattern.permute.xlu0 0
    %201 = vperm.xlu0 %200, %v170
    %v202 = vpop.permute.xlu0 %201
    %203 = vset.pattern.permute.xlu0 0
    %204 = vperm.xlu0 %203, %v171
    %v205 = vpop.permute.xlu0 %204
    %206 = vset.pattern.permute.xlu0 0
    %207 = vperm.xlu0 %206, %v172
    %v208 = vpop.permute.xlu0 %207
    %209 = vset.pattern.permute.xlu0 0
    %210 = vperm.xlu0 %209, %v173
    %v211 = vpop.permute.xlu0 %210
    %212 = vset.pattern.permute.xlu0 0
    %213 = vperm.xlu0 %212, %v174
    %v214 = vpop.permute.xlu0 %213
    %215 = vset.pattern.permute.xlu0 0
    %216 = vperm.xlu0 %215, %v175
    %v217 = vpop.permute.xlu0 %216
    %218 = vset.pattern.permute.xlu0 0
    %219 = vperm.xlu0 %218, %v176
    %v220 = vpop.permute.xlu0 %219
    %221 = vset.pattern.permute.xlu0 0
    %222 = vperm.xlu0 %221, %v177
    %v223 = vpop.permute.xlu0 %222
    %224 = vset.pattern.permute.xlu0 0
    %225 = vperm.xlu0 %224, %v178
    %v226 = vpop.permute.xlu0 %225
    %vm227 = vcmp.eq.s32.totalorder %v181, %v26
    %vm228 = vcmp.eq.s32.totalorder %v184, %v26
    %vm229 = vcmp.eq.s32.totalorder %v187, %v26
    %vm230 = vcmp.eq.s32.totalorder %v190, %v26
    %vm231 = vcmp.eq.s32.totalorder %v193, %v26
    %vm232 = vcmp.eq.s32.totalorder %v196, %v26
    %vm233 = vcmp.eq.s32.totalorder %v199, %v26
    %vm234 = vcmp.eq.s32.totalorder %v202, %v26
    %vm235 = vcmp.eq.s32.totalorder %v205, %v26
    %vm236 = vcmp.eq.s32.totalorder %v208, %v26
    %vm237 = vcmp.eq.s32.totalorder %v211, %v26
    %vm238 = vcmp.eq.s32.totalorder %v214, %v26
    %vm239 = vcmp.eq.s32.totalorder %v217, %v26
    %vm240 = vcmp.eq.s32.totalorder %v220, %v26
    %vm241 = vcmp.eq.s32.totalorder %v223, %v26
    %vm242 = vcmp.eq.s32.totalorder %v226, %v26
    %v243 = vsel %vm227, 1, 0
    %v244 = vsel %vm228, 1, 0
    %v245 = vsel %vm229, 1, 0
    %v246 = vsel %vm230, 1, 0
    %v247 = vsel %vm231, 1, 0
    %v248 = vsel %vm232, 1, 0
    %v249 = vsel %vm233, 1, 0
    %v250 = vsel %vm234, 1, 0
    %v251 = vsel %vm235, 1, 0
    %v252 = vsel %vm236, 1, 0
    %v253 = vsel %vm237, 1, 0
    %v254 = vsel %vm238, 1, 0
    %v255 = vsel %vm239, 1, 0
    %v256 = vsel %vm240, 1, 0
    %v257 = vsel %vm241, 1, 0
    %v258 = vsel %vm242, 1, 0
    %v259 = vcvt.s32.f32 %v243
    %v260 = vcvt.s32.f32 %v244
    %v261 = vcvt.s32.f32 %v245
    %v262 = vcvt.s32.f32 %v246
    %v263 = vcvt.s32.f32 %v247
    %v264 = vcvt.s32.f32 %v248
    %v265 = vcvt.s32.f32 %v249
    %v266 = vcvt.s32.f32 %v250
    %v267 = vcvt.s32.f32 %v251
    %v268 = vcvt.s32.f32 %v252
    %v269 = vcvt.s32.f32 %v253
    %v270 = vcvt.s32.f32 %v254
    %v271 = vcvt.s32.f32 %v255
    %v272 = vcvt.s32.f32 %v256
    %v273 = vcvt.s32.f32 %v257
    %v274 = vcvt.s32.f32 %v258
    %v275 = vpack.c.bf16 %v260, %v259
    %v276 = vpack.c.bf16 %v262, %v261
    %v277 = vpack.c.bf16 %v264, %v263
    %v278 = vpack.c.bf16 %v266, %v265
    %v279 = vpack.c.bf16 %v268, %v267
    %v280 = vpack.c.bf16 %v270, %v269
    %v281 = vpack.c.bf16 %v272, %v271
    %v282 = vpack.c.bf16 %v274, %v273
    %v283 = vld [vmem:[%s1 + $0x40] sm:$0xf]
    %v284 = vld [vmem:[%s1 + $0x44] sm:$0xf]
    %v285 = vld [vmem:[%s1 + $0x48] sm:$0xf]
    %v286 = vld [vmem:[%s1 + $0x4c] sm:$0xf]
    %v287 = vld [vmem:[%s1 + $0x50] sm:$0xf]
    %v288 = vld [vmem:[%s1 + $0x54] sm:$0xf]
    %v289 = vld [vmem:[%s1 + $0x58] sm:$0xf]
    %v290 = vld [vmem:[%s1 + $0x5c] sm:$0xf]
    %v291 = vld [vmem:[%s1 + $0x60] sm:$0xf]
    %v292 = vld [vmem:[%s1 + $0x64] sm:$0xf]
    %v293 = vld [vmem:[%s1 + $0x68] sm:$0xf]
    %v294 = vld [vmem:[%s1 + $0x6c] sm:$0xf]
    %v295 = vld [vmem:[%s1 + $0x70] sm:$0xf]
    %v296 = vld [vmem:[%s1 + $0x74] sm:$0xf]
    %v297 = vld [vmem:[%s1 + $0x78] sm:$0xf]
    %v298 = vld [vmem:[%s1 + $0x7c] sm:$0xf]
    %v315 = vunpack.c.l.b16 %v283
    %v316 = vunpack.c.l.b16 %v284
    %v317 = vunpack.c.l.b16 %v285
    %v318 = vunpack.c.l.b16 %v286
    %v319 = vunpack.c.l.b16 %v287
    %v320 = vunpack.c.l.b16 %v288
    %v321 = vunpack.c.l.b16 %v289
    %v322 = vunpack.c.l.b16 %v290
    %v323 = vunpack.c.l.b16 %v291
    %v324 = vunpack.c.l.b16 %v292
    %v325 = vunpack.c.l.b16 %v293
    %v326 = vunpack.c.l.b16 %v294
    %v327 = vunpack.c.l.b16 %v295
    %v328 = vunpack.c.l.b16 %v296
    %v329 = vunpack.c.l.b16 %v297
    %v330 = vunpack.c.l.b16 %v298
    %v331 = vpack.c.b16 %v316, %v315
    %v332 = vpack.c.b16 %v318, %v317
    %v333 = vpack.c.b16 %v320, %v319
    %v334 = vpack.c.b16 %v322, %v321
    %v335 = vpack.c.b16 %v324, %v323
    %v336 = vpack.c.b16 %v326, %v325
    %v337 = vpack.c.b16 %v328, %v327
    %v338 = vpack.c.b16 %v330, %v329
    %347 = vmatprep.subr.bf16.mxu0 0
    %348 = vmatpush1.bf16.msra.mxu0 %v338
    %349 = vmatprep.subr.bf16.mxu0 0
    %350 = vmatpush1.bf16.msra.mxu0 %v337
    %351 = vmatprep.subr.bf16.mxu0 0
    %352 = vmatpush1.bf16.msra.mxu0 %v336
    %353 = vmatprep.subr.bf16.mxu0 0
    %354 = vmatpush1.bf16.msra.mxu0 %v335
    %355 = vmatprep.subr.bf16.mxu0 0
    %356 = vmatpush1.bf16.msra.mxu0 %v334
    %357 = vmatprep.subr.bf16.mxu0 0
    %358 = vmatpush1.bf16.msra.mxu0 %v333
    %359 = vmatprep.subr.bf16.mxu0 0
    %360 = vmatpush1.bf16.msra.mxu0 %v332
    %361 = vmatprep.subr.bf16.mxu0 0
    %362 = vmatpush1.bf16.msra.mxu0 %v331
    %363 = vmatprep.subr.bf16.mxu0 0
    %364 = vmatpush2.bf16.msra.mxu0 0
    %365 = vmatprep.subr.bf16.mxu0 0
    %366 = vmatpush2.bf16.msra.mxu0 0
    %367 = vmatprep.subr.bf16.mxu0 0
    %368 = vmatpush2.bf16.msra.mxu0 0
    %369 = vmatprep.subr.bf16.mxu0 0
    %370 = vmatpush2.bf16.msra.mxu0 0
    %371 = vmatprep.subr.bf16.mxu0 0
    %372 = vmatpush2.bf16.msra.mxu0 0
    %373 = vmatprep.subr.bf16.mxu0 0
    %374 = vmatpush2.bf16.msra.mxu0 0
    %375 = vmatprep.subr.bf16.mxu0 0
    %376 = vmatpush2.bf16.msra.mxu0 0
    %377 = vmatprep.subr.bf16.mxu0 0
    %378 = vmatpush2.bf16.msra.mxu0 0
    %379 = vmatprep.mubr.bf16.mxu0 0
    %380 = vmatmul.mubr.bf16.gmra.mxu0 %v275
    %v381 = vpop.f32.mrf.mxu0
    %v382 = vadd.f32 0.0, %v381
    %v383 = vpop.f32.mrf.mxu0
    %v384 = vpop.f32.mrf.mxu0
    %v385 = vadd.f32 0.0, %v384
    %v386 = vpop.f32.mrf.mxu0
    %387 = vmatprep.mubr.bf16.mxu0 0
    %388 = vmatmul.mubr.bf16.gmra.mxu0 %v276
    %v389 = vpop.f32.mrf.mxu0
    %v390 = vadd.f32 0.0, %v389
    %v391 = vpop.f32.mrf.mxu0
    %v392 = vpop.f32.mrf.mxu0
    %v393 = vadd.f32 0.0, %v392
    %v394 = vpop.f32.mrf.mxu0
    %395 = vmatprep.mubr.bf16.mxu0 0
    %396 = vmatmul.mubr.bf16.gmra.mxu0 %v277
    %v397 = vpop.f32.mrf.mxu0
    %v398 = vadd.f32 0.0, %v397
    %v399 = vpop.f32.mrf.mxu0
    %v400 = vpop.f32.mrf.mxu0
    %v401 = vadd.f32 0.0, %v400
    %v402 = vpop.f32.mrf.mxu0
    %403 = vmatprep.mubr.bf16.mxu0 0
    %404 = vmatmul.mubr.bf16.gmra.mxu0 %v278
    %v405 = vpop.f32.mrf.mxu0
    %v406 = vadd.f32 0.0, %v405
    %v407 = vpop.f32.mrf.mxu0
    %v408 = vpop.f32.mrf.mxu0
    %v409 = vadd.f32 0.0, %v408
    %v410 = vpop.f32.mrf.mxu0
    %411 = vmatprep.mubr.bf16.mxu0 0
    %412 = vmatmul.mubr.bf16.gmra.mxu0 %v279
    %v413 = vpop.f32.mrf.mxu0
    %v414 = vadd.f32 0.0, %v413
    %v415 = vpop.f32.mrf.mxu0
    %v416 = vpop.f32.mrf.mxu0
    %v417 = vadd.f32 0.0, %v416
    %v418 = vpop.f32.mrf.mxu0
    %419 = vmatprep.mubr.bf16.mxu0 0
    %420 = vmatmul.mubr.bf16.gmra.mxu0 %v280
    %v421 = vpop.f32.mrf.mxu0
    %v422 = vadd.f32 0.0, %v421
    %v423 = vpop.f32.mrf.mxu0
    %v424 = vpop.f32.mrf.mxu0
    %v425 = vadd.f32 0.0, %v424
    %v426 = vpop.f32.mrf.mxu0
    %427 = vmatprep.mubr.bf16.mxu0 0
    %428 = vmatmul.mubr.bf16.gmra.mxu0 %v281
    %v429 = vpop.f32.mrf.mxu0
    %v430 = vadd.f32 0.0, %v429
    %v431 = vpop.f32.mrf.mxu0
    %v432 = vpop.f32.mrf.mxu0
    %v433 = vadd.f32 0.0, %v432
    %v434 = vpop.f32.mrf.mxu0
    %435 = vmatprep.mubr.bf16.mxu0 0
    %436 = vmatmul.mubr.bf16.gmra.mxu0 %v282
    %v437 = vpop.f32.mrf.mxu0
    %v438 = vadd.f32 0.0, %v437
    %v439 = vpop.f32.mrf.mxu0
    %v440 = vpop.f32.mrf.mxu0
    %v441 = vadd.f32 0.0, %v440
    %v442 = vpop.f32.mrf.mxu0
    %443 = vdwg.mxu0
    %v460 = vunpack.c.l.b16 %v147
    %v461 = vunpack.c.l.b16 %v148
    %v462 = vunpack.c.l.b16 %v149
    %v463 = vunpack.c.l.b16 %v150
    %v464 = vunpack.c.l.b16 %v151
    %v465 = vunpack.c.l.b16 %v152
    %v466 = vunpack.c.l.b16 %v153
    %v467 = vunpack.c.l.b16 %v154
    %v468 = vunpack.c.l.b16 %v155
    %v469 = vunpack.c.l.b16 %v156
    %v470 = vunpack.c.l.b16 %v157
    %v471 = vunpack.c.l.b16 %v158
    %v472 = vunpack.c.l.b16 %v159
    %v473 = vunpack.c.l.b16 %v160
    %v474 = vunpack.c.l.b16 %v161
    %v475 = vunpack.c.l.b16 %v162
    %v476 = vpack.c.b16 %v461, %v460
    %v477 = vpack.c.b16 %v463, %v462
    %v478 = vpack.c.b16 %v465, %v464
    %v479 = vpack.c.b16 %v467, %v466
    %v480 = vpack.c.b16 %v469, %v468
    %v481 = vpack.c.b16 %v471, %v470
    %v482 = vpack.c.b16 %v473, %v472
    %v483 = vpack.c.b16 %v475, %v474
    %492 = vmatprep.subr.bf16.mxu0 0
    %493 = vmatpush1.bf16.msra.mxu0 %v483
    %494 = vmatprep.subr.bf16.mxu0 0
    %495 = vmatpush1.bf16.msra.mxu0 %v482
    %496 = vmatprep.subr.bf16.mxu0 0
    %497 = vmatpush1.bf16.msra.mxu0 %v481
    %498 = vmatprep.subr.bf16.mxu0 0
    %499 = vmatpush1.bf16.msra.mxu0 %v480
    %500 = vmatprep.subr.bf16.mxu0 0
    %501 = vmatpush1.bf16.msra.mxu0 %v479
    %502 = vmatprep.subr.bf16.mxu0 0
    %503 = vmatpush1.bf16.msra.mxu0 %v478
    %504 = vmatprep.subr.bf16.mxu0 0
    %505 = vmatpush1.bf16.msra.mxu0 %v477
    %506 = vmatprep.subr.bf16.mxu0 0
    %507 = vmatpush1.bf16.msra.mxu0 %v476
    %508 = vmatprep.subr.bf16.mxu0 0
    %509 = vmatpush2.bf16.msra.mxu0 0
    %510 = vmatprep.subr.bf16.mxu0 0
    %511 = vmatpush2.bf16.msra.mxu0 0
    %512 = vmatprep.subr.bf16.mxu0 0
    %513 = vmatpush2.bf16.msra.mxu0 0
    %514 = vmatprep.subr.bf16.mxu0 0
    %515 = vmatpush2.bf16.msra.mxu0 0
    %516 = vmatprep.subr.bf16.mxu0 0
    %517 = vmatpush2.bf16.msra.mxu0 0
    %518 = vmatprep.subr.bf16.mxu0 0
    %519 = vmatpush2.bf16.msra.mxu0 0
    %520 = vmatprep.subr.bf16.mxu0 0
    %521 = vmatpush2.bf16.msra.mxu0 0
    %522 = vmatprep.subr.bf16.mxu0 0
    %523 = vmatpush2.bf16.msra.mxu0 0
    %524 = vmatprep.mubr.bf16.mxu0 0
    %525 = vmatmul.mubr.bf16.gmra.mxu0 %v139
    %v526 = vpop.f32.mrf.mxu0
    %v527 = vadd.f32 %v382, %v526
    %v528 = vpop.f32.mrf.mxu0
    %v529 = vpop.f32.mrf.mxu0
    %v530 = vadd.f32 %v385, %v529
    %v531 = vpop.f32.mrf.mxu0
    %532 = vmatprep.mubr.bf16.mxu0 0
    %533 = vmatmul.mubr.bf16.gmra.mxu0 %v140
    %v534 = vpop.f32.mrf.mxu0
    %v535 = vadd.f32 %v390, %v534
    %v536 = vpop.f32.mrf.mxu0
    %v537 = vpop.f32.mrf.mxu0
    %v538 = vadd.f32 %v393, %v537
    %v539 = vpop.f32.mrf.mxu0
    %540 = vmatprep.mubr.bf16.mxu0 0
    %541 = vmatmul.mubr.bf16.gmra.mxu0 %v141
    %v542 = vpop.f32.mrf.mxu0
    %v543 = vadd.f32 %v398, %v542
    %v544 = vpop.f32.mrf.mxu0
    %v545 = vpop.f32.mrf.mxu0
    %v546 = vadd.f32 %v401, %v545
    %v547 = vpop.f32.mrf.mxu0
    %548 = vmatprep.mubr.bf16.mxu0 0
    %549 = vmatmul.mubr.bf16.gmra.mxu0 %v142
    %v550 = vpop.f32.mrf.mxu0
    %v551 = vadd.f32 %v406, %v550
    %v552 = vpop.f32.mrf.mxu0
    %v553 = vpop.f32.mrf.mxu0
    %v554 = vadd.f32 %v409, %v553
    %v555 = vpop.f32.mrf.mxu0
    %556 = vmatprep.mubr.bf16.mxu0 0
    %557 = vmatmul.mubr.bf16.gmra.mxu0 %v143
    %v558 = vpop.f32.mrf.mxu0
    %v559 = vadd.f32 %v414, %v558
    %v560 = vpop.f32.mrf.mxu0
    %v561 = vpop.f32.mrf.mxu0
    %v562 = vadd.f32 %v417, %v561
    %v563 = vpop.f32.mrf.mxu0
    %564 = vmatprep.mubr.bf16.mxu0 0
    %565 = vmatmul.mubr.bf16.gmra.mxu0 %v144
    %v566 = vpop.f32.mrf.mxu0
    %v567 = vadd.f32 %v422, %v566
    %v568 = vpop.f32.mrf.mxu0
    %v569 = vpop.f32.mrf.mxu0
    %v570 = vadd.f32 %v425, %v569
    %v571 = vpop.f32.mrf.mxu0
    %572 = vmatprep.mubr.bf16.mxu0 0
    %573 = vmatmul.mubr.bf16.gmra.mxu0 %v145
    %v574 = vpop.f32.mrf.mxu0
    %v575 = vadd.f32 %v430, %v574
    %v576 = vpop.f32.mrf.mxu0
    %v577 = vpop.f32.mrf.mxu0
    %v578 = vadd.f32 %v433, %v577
    %v579 = vpop.f32.mrf.mxu0
    %580 = vmatprep.mubr.bf16.mxu0 0
    %581 = vmatmul.mubr.bf16.gmra.mxu0 %v146
    %v582 = vpop.f32.mrf.mxu0
    %v583 = vadd.f32 %v438, %v582
    %v584 = vpop.f32.mrf.mxu0
    %v585 = vpop.f32.mrf.mxu0
    %v586 = vadd.f32 %v441, %v585
    %v587 = vpop.f32.mrf.mxu0
    %588 = vdwg.mxu0
    %v589 = vld [vmem:[%s0 + $0x100] sm:$0xff]
    %v590 = vld [vmem:[%s0 + $0x108] sm:$0xff]
    %v591 = vld [vmem:[%s0 + $0x110] sm:$0xff]
    %v592 = vld [vmem:[%s0 + $0x118] sm:$0xff]
    %v593 = vld [vmem:[%s0 + $0x120] sm:$0xff]
    %v594 = vld [vmem:[%s0 + $0x128] sm:$0xff]
    %v595 = vld [vmem:[%s0 + $0x130] sm:$0xff]
    %v596 = vld [vmem:[%s0 + $0x138] sm:$0xff]
    %v597 = vld [vmem:[%s0 + $0x140] sm:$0xff]
    %v598 = vld [vmem:[%s0 + $0x148] sm:$0xff]
    %v599 = vld [vmem:[%s0 + $0x150] sm:$0xff]
    %v600 = vld [vmem:[%s0 + $0x158] sm:$0xff]
    %v601 = vld [vmem:[%s0 + $0x160] sm:$0xff]
    %v602 = vld [vmem:[%s0 + $0x168] sm:$0xff]
    %v603 = vld [vmem:[%s0 + $0x170] sm:$0xff]
    %v604 = vld [vmem:[%s0 + $0x178] sm:$0xff]
    %605 = vset.pattern.permute.xlu0 0
    %606 = vperm.xlu0 %605, %v589
    %v607 = vpop.permute.xlu0 %606
    %608 = vset.pattern.permute.xlu0 0
    %609 = vperm.xlu0 %608, %v590
    %v610 = vpop.permute.xlu0 %609
    %611 = vset.pattern.permute.xlu0 0
    %612 = vperm.xlu0 %611, %v591
    %v613 = vpop.permute.xlu0 %612
    %614 = vset.pattern.permute.xlu0 0
    %615 = vperm.xlu0 %614, %v592
    %v616 = vpop.permute.xlu0 %615
    %617 = vset.pattern.permute.xlu0 0
    %618 = vperm.xlu0 %617, %v593
    %v619 = vpop.permute.xlu0 %618
    %620 = vset.pattern.permute.xlu0 0
    %621 = vperm.xlu0 %620, %v594
    %v622 = vpop.permute.xlu0 %621
    %623 = vset.pattern.permute.xlu0 0
    %624 = vperm.xlu0 %623, %v595
    %v625 = vpop.permute.xlu0 %624
    %626 = vset.pattern.permute.xlu0 0
    %627 = vperm.xlu0 %626, %v596
    %v628 = vpop.permute.xlu0 %627
    %629 = vset.pattern.permute.xlu0 0
    %630 = vperm.xlu0 %629, %v597
    %v631 = vpop.permute.xlu0 %630
    %632 = vset.pattern.permute.xlu0 0
    %633 = vperm.xlu0 %632, %v598
    %v634 = vpop.permute.xlu0 %633
    %635 = vset.pattern.permute.xlu0 0
    %636 = vperm.xlu0 %635, %v599
    %v637 = vpop.permute.xlu0 %636
    %638 = vset.pattern.permute.xlu0 0
    %639 = vperm.xlu0 %638, %v600
    %v640 = vpop.permute.xlu0 %639
    %641 = vset.pattern.permute.xlu0 0
    %642 = vperm.xlu0 %641, %v601
    %v643 = vpop.permute.xlu0 %642
    %644 = vset.pattern.permute.xlu0 0
    %645 = vperm.xlu0 %644, %v602
    %v646 = vpop.permute.xlu0 %645
    %647 = vset.pattern.permute.xlu0 0
    %648 = vperm.xlu0 %647, %v603
    %v649 = vpop.permute.xlu0 %648
    %650 = vset.pattern.permute.xlu0 0
    %651 = vperm.xlu0 %650, %v604
    %v652 = vpop.permute.xlu0 %651
    %vm653 = vcmp.eq.s32.totalorder %v607, %v26
    %vm654 = vcmp.eq.s32.totalorder %v610, %v26
    %vm655 = vcmp.eq.s32.totalorder %v613, %v26
    %vm656 = vcmp.eq.s32.totalorder %v616, %v26
    %vm657 = vcmp.eq.s32.totalorder %v619, %v26
    %vm658 = vcmp.eq.s32.totalorder %v622, %v26
    %vm659 = vcmp.eq.s32.totalorder %v625, %v26
    %vm660 = vcmp.eq.s32.totalorder %v628, %v26
    %vm661 = vcmp.eq.s32.totalorder %v631, %v26
    %vm662 = vcmp.eq.s32.totalorder %v634, %v26
    %vm663 = vcmp.eq.s32.totalorder %v637, %v26
    %vm664 = vcmp.eq.s32.totalorder %v640, %v26
    %vm665 = vcmp.eq.s32.totalorder %v643, %v26
    %vm666 = vcmp.eq.s32.totalorder %v646, %v26
    %vm667 = vcmp.eq.s32.totalorder %v649, %v26
    %vm668 = vcmp.eq.s32.totalorder %v652, %v26
    %v669 = vsel %vm653, 1, 0
    %v670 = vsel %vm654, 1, 0
    %v671 = vsel %vm655, 1, 0
    %v672 = vsel %vm656, 1, 0
    %v673 = vsel %vm657, 1, 0
    %v674 = vsel %vm658, 1, 0
    %v675 = vsel %vm659, 1, 0
    %v676 = vsel %vm660, 1, 0
    %v677 = vsel %vm661, 1, 0
    %v678 = vsel %vm662, 1, 0
    %v679 = vsel %vm663, 1, 0
    %v680 = vsel %vm664, 1, 0
    %v681 = vsel %vm665, 1, 0
    %v682 = vsel %vm666, 1, 0
    %v683 = vsel %vm667, 1, 0
    %v684 = vsel %vm668, 1, 0
    %v685 = vcvt.s32.f32 %v669
    %v686 = vcvt.s32.f32 %v670
    %v687 = vcvt.s32.f32 %v671
    %v688 = vcvt.s32.f32 %v672
    %v689 = vcvt.s32.f32 %v673
    %v690 = vcvt.s32.f32 %v674
    %v691 = vcvt.s32.f32 %v675
    %v692 = vcvt.s32.f32 %v676
    %v693 = vcvt.s32.f32 %v677
    %v694 = vcvt.s32.f32 %v678
    %v695 = vcvt.s32.f32 %v679
    %v696 = vcvt.s32.f32 %v680
    %v697 = vcvt.s32.f32 %v681
    %v698 = vcvt.s32.f32 %v682
    %v699 = vcvt.s32.f32 %v683
    %v700 = vcvt.s32.f32 %v684
    %v701 = vpack.c.bf16 %v686, %v685
    %v702 = vpack.c.bf16 %v688, %v687
    %v703 = vpack.c.bf16 %v690, %v689
    %v704 = vpack.c.bf16 %v692, %v691
    %v705 = vpack.c.bf16 %v694, %v693
    %v706 = vpack.c.bf16 %v696, %v695
    %v707 = vpack.c.bf16 %v698, %v697
    %v708 = vpack.c.bf16 %v700, %v699
    %v709 = vld [vmem:[%s1 + $0x80] sm:$0xf]
    %v710 = vld [vmem:[%s1 + $0x84] sm:$0xf]
    %v711 = vld [vmem:[%s1 + $0x88] sm:$0xf]
    %v712 = vld [vmem:[%s1 + $0x8c] sm:$0xf]
    %v713 = vld [vmem:[%s1 + $0x90] sm:$0xf]
    %v714 = vld [vmem:[%s1 + $0x94] sm:$0xf]
    %v715 = vld [vmem:[%s1 + $0x98] sm:$0xf]
    %v716 = vld [vmem:[%s1 + $0x9c] sm:$0xf]
    %v717 = vld [vmem:[%s1 + $0xa0] sm:$0xf]
    %v718 = vld [vmem:[%s1 + $0xa4] sm:$0xf]
    %v719 = vld [vmem:[%s1 + $0xa8] sm:$0xf]
    %v720 = vld [vmem:[%s1 + $0xac] sm:$0xf]
    %v721 = vld [vmem:[%s1 + $0xb0] sm:$0xf]
    %v722 = vld [vmem:[%s1 + $0xb4] sm:$0xf]
    %v723 = vld [vmem:[%s1 + $0xb8] sm:$0xf]
    %v724 = vld [vmem:[%s1 + $0xbc] sm:$0xf]
    %v741 = vunpack.c.l.b16 %v709
    %v742 = vunpack.c.l.b16 %v710
    %v743 = vunpack.c.l.b16 %v711
    %v744 = vunpack.c.l.b16 %v712
    %v745 = vunpack.c.l.b16 %v713
    %v746 = vunpack.c.l.b16 %v714
    %v747 = vunpack.c.l.b16 %v715
    %v748 = vunpack.c.l.b16 %v716
    %v749 = vunpack.c.l.b16 %v717
    %v750 = vunpack.c.l.b16 %v718
    %v751 = vunpack.c.l.b16 %v719
    %v752 = vunpack.c.l.b16 %v720
    %v753 = vunpack.c.l.b16 %v721
    %v754 = vunpack.c.l.b16 %v722
    %v755 = vunpack.c.l.b16 %v723
    %v756 = vunpack.c.l.b16 %v724
    %v757 = vpack.c.b16 %v742, %v741
    %v758 = vpack.c.b16 %v744, %v743
    %v759 = vpack.c.b16 %v746, %v745
    %v760 = vpack.c.b16 %v748, %v747
    %v761 = vpack.c.b16 %v750, %v749
    %v762 = vpack.c.b16 %v752, %v751
    %v763 = vpack.c.b16 %v754, %v753
    %v764 = vpack.c.b16 %v756, %v755
    %773 = vmatprep.subr.bf16.mxu0 0
    %774 = vmatpush1.bf16.msra.mxu0 %v764
    %775 = vmatprep.subr.bf16.mxu0 0
    %776 = vmatpush1.bf16.msra.mxu0 %v763
    %777 = vmatprep.subr.bf16.mxu0 0
    %778 = vmatpush1.bf16.msra.mxu0 %v762
    %779 = vmatprep.subr.bf16.mxu0 0
    %780 = vmatpush1.bf16.msra.mxu0 %v761
    %781 = vmatprep.subr.bf16.mxu0 0
    %782 = vmatpush1.bf16.msra.mxu0 %v760
    %783 = vmatprep.subr.bf16.mxu0 0
    %784 = vmatpush1.bf16.msra.mxu0 %v759
    %785 = vmatprep.subr.bf16.mxu0 0
    %786 = vmatpush1.bf16.msra.mxu0 %v758
    %787 = vmatprep.subr.bf16.mxu0 0
    %788 = vmatpush1.bf16.msra.mxu0 %v757
    %789 = vmatprep.subr.bf16.mxu0 0
    %790 = vmatpush2.bf16.msra.mxu0 0
    %791 = vmatprep.subr.bf16.mxu0 0
    %792 = vmatpush2.bf16.msra.mxu0 0
    %793 = vmatprep.subr.bf16.mxu0 0
    %794 = vmatpush2.bf16.msra.mxu0 0
    %795 = vmatprep.subr.bf16.mxu0 0
    %796 = vmatpush2.bf16.msra.mxu0 0
    %797 = vmatprep.subr.bf16.mxu0 0
    %798 = vmatpush2.bf16.msra.mxu0 0
    %799 = vmatprep.subr.bf16.mxu0 0
    %800 = vmatpush2.bf16.msra.mxu0 0
    %801 = vmatprep.subr.bf16.mxu0 0
    %802 = vmatpush2.bf16.msra.mxu0 0
    %803 = vmatprep.subr.bf16.mxu0 0
    %804 = vmatpush2.bf16.msra.mxu0 0
    %805 = vmatprep.mubr.bf16.mxu0 0
    %806 = vmatmul.mubr.bf16.gmra.mxu0 %v701
    %v807 = vpop.f32.mrf.mxu0
    %v808 = vadd.f32 0.0, %v807
    %v809 = vpop.f32.mrf.mxu0
    %v810 = vpop.f32.mrf.mxu0
    %v811 = vadd.f32 0.0, %v810
    %v812 = vpop.f32.mrf.mxu0
    %813 = vmatprep.mubr.bf16.mxu0 0
    %814 = vmatmul.mubr.bf16.gmra.mxu0 %v702
    %v815 = vpop.f32.mrf.mxu0
    %v816 = vadd.f32 0.0, %v815
    %v817 = vpop.f32.mrf.mxu0
    %v818 = vpop.f32.mrf.mxu0
    %v819 = vadd.f32 0.0, %v818
    %v820 = vpop.f32.mrf.mxu0
    %821 = vmatprep.mubr.bf16.mxu0 0
    %822 = vmatmul.mubr.bf16.gmra.mxu0 %v703
    %v823 = vpop.f32.mrf.mxu0
    %v824 = vadd.f32 0.0, %v823
    %v825 = vpop.f32.mrf.mxu0
    %v826 = vpop.f32.mrf.mxu0
    %v827 = vadd.f32 0.0, %v826
    %v828 = vpop.f32.mrf.mxu0
    %829 = vmatprep.mubr.bf16.mxu0 0
    %830 = vmatmul.mubr.bf16.gmra.mxu0 %v704
    %v831 = vpop.f32.mrf.mxu0
    %v832 = vadd.f32 0.0, %v831
    %v833 = vpop.f32.mrf.mxu0
    %v834 = vpop.f32.mrf.mxu0
    %v835 = vadd.f32 0.0, %v834
    %v836 = vpop.f32.mrf.mxu0
    %837 = vmatprep.mubr.bf16.mxu0 0
    %838 = vmatmul.mubr.bf16.gmra.mxu0 %v705
    %v839 = vpop.f32.mrf.mxu0
    %v840 = vadd.f32 0.0, %v839
    %v841 = vpop.f32.mrf.mxu0
    %v842 = vpop.f32.mrf.mxu0
    %v843 = vadd.f32 0.0, %v842
    %v844 = vpop.f32.mrf.mxu0
    %845 = vmatprep.mubr.bf16.mxu0 0
    %846 = vmatmul.mubr.bf16.gmra.mxu0 %v706
    %v847 = vpop.f32.mrf.mxu0
    %v848 = vadd.f32 0.0, %v847
    %v849 = vpop.f32.mrf.mxu0
    %v850 = vpop.f32.mrf.mxu0
    %v851 = vadd.f32 0.0, %v850
    %v852 = vpop.f32.mrf.mxu0
    %853 = vmatprep.mubr.bf16.mxu0 0
    %854 = vmatmul.mubr.bf16.gmra.mxu0 %v707
    %v855 = vpop.f32.mrf.mxu0
    %v856 = vadd.f32 0.0, %v855
    %v857 = vpop.f32.mrf.mxu0
    %v858 = vpop.f32.mrf.mxu0
    %v859 = vadd.f32 0.0, %v858
    %v860 = vpop.f32.mrf.mxu0
    %861 = vmatprep.mubr.bf16.mxu0 0
    %862 = vmatmul.mubr.bf16.gmra.mxu0 %v708
    %v863 = vpop.f32.mrf.mxu0
    %v864 = vadd.f32 0.0, %v863
    %v865 = vpop.f32.mrf.mxu0
    %v866 = vpop.f32.mrf.mxu0
    %v867 = vadd.f32 0.0, %v866
    %v868 = vpop.f32.mrf.mxu0
    %869 = vdwg.mxu0
    %v870 = vadd.f32 %v527, %v808
    %v871 = vadd.f32 %v530, %v811
    %v872 = vadd.f32 %v535, %v816
    %v873 = vadd.f32 %v538, %v819
    %v874 = vadd.f32 %v543, %v824
    %v875 = vadd.f32 %v546, %v827
    %v876 = vadd.f32 %v551, %v832
    %v877 = vadd.f32 %v554, %v835
    %v878 = vadd.f32 %v559, %v840
    %v879 = vadd.f32 %v562, %v843
    %v880 = vadd.f32 %v567, %v848
    %v881 = vadd.f32 %v570, %v851
    %v882 = vadd.f32 %v575, %v856
    %v883 = vadd.f32 %v578, %v859
    %v884 = vadd.f32 %v583, %v864
    %v885 = vadd.f32 %v586, %v867
    %v886 = vld [vmem:[%s0 + $0x180] sm:$0xff]
    %v887 = vld [vmem:[%s0 + $0x188] sm:$0xff]
    %v888 = vld [vmem:[%s0 + $0x190] sm:$0xff]
    %v889 = vld [vmem:[%s0 + $0x198] sm:$0xff]
    %v890 = vld [vmem:[%s0 + $0x1a0] sm:$0xff]
    %v891 = vld [vmem:[%s0 + $0x1a8] sm:$0xff]
    %v892 = vld [vmem:[%s0 + $0x1b0] sm:$0xff]
    %v893 = vld [vmem:[%s0 + $0x1b8] sm:$0xff]
    %v894 = vld [vmem:[%s0 + $0x1c0] sm:$0xff]
    %v895 = vld [vmem:[%s0 + $0x1c8] sm:$0xff]
    %v896 = vld [vmem:[%s0 + $0x1d0] sm:$0xff]
    %v897 = vld [vmem:[%s0 + $0x1d8] sm:$0xff]
    %v898 = vld [vmem:[%s0 + $0x1e0] sm:$0xff]
    %v899 = vld [vmem:[%s0 + $0x1e8] sm:$0xff]
    %v900 = vld [vmem:[%s0 + $0x1f0] sm:$0xff]
    %v901 = vld [vmem:[%s0 + $0x1f8] sm:$0xff]
    %902 = vset.pattern.permute.xlu0 0
    %903 = vperm.xlu0 %902, %v886
    %v904 = vpop.permute.xlu0 %903
    %905 = vset.pattern.permute.xlu0 0
    %906 = vperm.xlu0 %905, %v887
    %v907 = vpop.permute.xlu0 %906
    %908 = vset.pattern.permute.xlu0 0
    %909 = vperm.xlu0 %908, %v888
    %v910 = vpop.permute.xlu0 %909
    %911 = vset.pattern.permute.xlu0 0
    %912 = vperm.xlu0 %911, %v889
    %v913 = vpop.permute.xlu0 %912
    %914 = vset.pattern.permute.xlu0 0
    %915 = vperm.xlu0 %914, %v890
    %v916 = vpop.permute.xlu0 %915
    %917 = vset.pattern.permute.xlu0 0
    %918 = vperm.xlu0 %917, %v891
    %v919 = vpop.permute.xlu0 %918
    %920 = vset.pattern.permute.xlu0 0
    %921 = vperm.xlu0 %920, %v892
    %v922 = vpop.permute.xlu0 %921
    %923 = vset.pattern.permute.xlu0 0
    %924 = vperm.xlu0 %923, %v893
    %v925 = vpop.permute.xlu0 %924
    %926 = vset.pattern.permute.xlu0 0
    %927 = vperm.xlu0 %926, %v894
    %v928 = vpop.permute.xlu0 %927
    %929 = vset.pattern.permute.xlu0 0
    %930 = vperm.xlu0 %929, %v895
    %v931 = vpop.permute.xlu0 %930
    %932 = vset.pattern.permute.xlu0 0
    %933 = vperm.xlu0 %932, %v896
    %v934 = vpop.permute.xlu0 %933
    %935 = vset.pattern.permute.xlu0 0
    %936 = vperm.xlu0 %935, %v897
    %v937 = vpop.permute.xlu0 %936
    %938 = vset.pattern.permute.xlu0 0
    %939 = vperm.xlu0 %938, %v898
    %v940 = vpop.permute.xlu0 %939
    %941 = vset.pattern.permute.xlu0 0
    %942 = vperm.xlu0 %941, %v899
    %v943 = vpop.permute.xlu0 %942
    %944 = vset.pattern.permute.xlu0 0
    %945 = vperm.xlu0 %944, %v900
    %v946 = vpop.permute.xlu0 %945
    %947 = vset.pattern.permute.xlu0 0
    %948 = vperm.xlu0 %947, %v901
    %v949 = vpop.permute.xlu0 %948
    %vm950 = vcmp.eq.s32.totalorder %v904, %v26
    %vm951 = vcmp.eq.s32.totalorder %v907, %v26
    %vm952 = vcmp.eq.s32.totalorder %v910, %v26
    %vm953 = vcmp.eq.s32.totalorder %v913, %v26
    %vm954 = vcmp.eq.s32.totalorder %v916, %v26
    %vm955 = vcmp.eq.s32.totalorder %v919, %v26
    %vm956 = vcmp.eq.s32.totalorder %v922, %v26
    %vm957 = vcmp.eq.s32.totalorder %v925, %v26
    %vm958 = vcmp.eq.s32.totalorder %v928, %v26
    %vm959 = vcmp.eq.s32.totalorder %v931, %v26
    %vm960 = vcmp.eq.s32.totalorder %v934, %v26
    %vm961 = vcmp.eq.s32.totalorder %v937, %v26
    %vm962 = vcmp.eq.s32.totalorder %v940, %v26
    %vm963 = vcmp.eq.s32.totalorder %v943, %v26
    %vm964 = vcmp.eq.s32.totalorder %v946, %v26
    %vm965 = vcmp.eq.s32.totalorder %v949, %v26
    %v966 = vsel %vm950, 1, 0
    %v967 = vsel %vm951, 1, 0
    %v968 = vsel %vm952, 1, 0
    %v969 = vsel %vm953, 1, 0
    %v970 = vsel %vm954, 1, 0
    %v971 = vsel %vm955, 1, 0
    %v972 = vsel %vm956, 1, 0
    %v973 = vsel %vm957, 1, 0
    %v974 = vsel %vm958, 1, 0
    %v975 = vsel %vm959, 1, 0
    %v976 = vsel %vm960, 1, 0
    %v977 = vsel %vm961, 1, 0
    %v978 = vsel %vm962, 1, 0
    %v979 = vsel %vm963, 1, 0
    %v980 = vsel %vm964, 1, 0
    %v981 = vsel %vm965, 1, 0
    %v982 = vcvt.s32.f32 %v966
    %v983 = vcvt.s32.f32 %v967
    %v984 = vcvt.s32.f32 %v968
    %v985 = vcvt.s32.f32 %v969
    %v986 = vcvt.s32.f32 %v970
    %v987 = vcvt.s32.f32 %v971
    %v988 = vcvt.s32.f32 %v972
    %v989 = vcvt.s32.f32 %v973
    %v990 = vcvt.s32.f32 %v974
    %v991 = vcvt.s32.f32 %v975
    %v992 = vcvt.s32.f32 %v976
    %v993 = vcvt.s32.f32 %v977
    %v994 = vcvt.s32.f32 %v978
    %v995 = vcvt.s32.f32 %v979
    %v996 = vcvt.s32.f32 %v980
    %v997 = vcvt.s32.f32 %v981
    %v998 = vpack.c.bf16 %v983, %v982
    %v999 = vpack.c.bf16 %v985, %v984
    %v1000 = vpack.c.bf16 %v987, %v986
    %v1001 = vpack.c.bf16 %v989, %v988
    %v1002 = vpack.c.bf16 %v991, %v990
    %v1003 = vpack.c.bf16 %v993, %v992
    %v1004 = vpack.c.bf16 %v995, %v994
    %v1005 = vpack.c.bf16 %v997, %v996
    %v1006 = vld [vmem:[%s1 + $0xc0] sm:$0xf]
    %v1007 = vld [vmem:[%s1 + $0xc4] sm:$0xf]
    %v1008 = vld [vmem:[%s1 + $0xc8] sm:$0xf]
    %v1009 = vld [vmem:[%s1 + $0xcc] sm:$0xf]
    %v1010 = vld [vmem:[%s1 + $0xd0] sm:$0xf]
    %v1011 = vld [vmem:[%s1 + $0xd4] sm:$0xf]
    %v1012 = vld [vmem:[%s1 + $0xd8] sm:$0xf]
    %v1013 = vld [vmem:[%s1 + $0xdc] sm:$0xf]
    %v1014 = vld [vmem:[%s1 + $0xe0] sm:$0xf]
    %v1015 = vld [vmem:[%s1 + $0xe4] sm:$0xf]
    %v1016 = vld [vmem:[%s1 + $0xe8] sm:$0xf]
    %v1017 = vld [vmem:[%s1 + $0xec] sm:$0xf]
    %v1018 = vld [vmem:[%s1 + $0xf0] sm:$0xf]
    %v1019 = vld [vmem:[%s1 + $0xf4] sm:$0xf]
    %v1020 = vld [vmem:[%s1 + $0xf8] sm:$0xf]
    %v1021 = vld [vmem:[%s1 + $0xfc] sm:$0xf]
    %v1038 = vunpack.c.l.b16 %v1006
    %v1039 = vunpack.c.l.b16 %v1007
    %v1040 = vunpack.c.l.b16 %v1008
    %v1041 = vunpack.c.l.b16 %v1009
    %v1042 = vunpack.c.l.b16 %v1010
    %v1043 = vunpack.c.l.b16 %v1011
    %v1044 = vunpack.c.l.b16 %v1012
    %v1045 = vunpack.c.l.b16 %v1013
    %v1046 = vunpack.c.l.b16 %v1014
    %v1047 = vunpack.c.l.b16 %v1015
    %v1048 = vunpack.c.l.b16 %v1016
    %v1049 = vunpack.c.l.b16 %v1017
    %v1050 = vunpack.c.l.b16 %v1018
    %v1051 = vunpack.c.l.b16 %v1019
    %v1052 = vunpack.c.l.b16 %v1020
    %v1053 = vunpack.c.l.b16 %v1021
    %v1054 = vpack.c.b16 %v1039, %v1038
    %v1055 = vpack.c.b16 %v1041, %v1040
    %v1056 = vpack.c.b16 %v1043, %v1042
    %v1057 = vpack.c.b16 %v1045, %v1044
    %v1058 = vpack.c.b16 %v1047, %v1046
    %v1059 = vpack.c.b16 %v1049, %v1048
    %v1060 = vpack.c.b16 %v1051, %v1050
    %v1061 = vpack.c.b16 %v1053, %v1052
    %1070 = vmatprep.subr.bf16.mxu0 0
    %1071 = vmatpush1.bf16.msra.mxu0 %v1061
    %1072 = vmatprep.subr.bf16.mxu0 0
    %1073 = vmatpush1.bf16.msra.mxu0 %v1060
    %1074 = vmatprep.subr.bf16.mxu0 0
    %1075 = vmatpush1.bf16.msra.mxu0 %v1059
    %1076 = vmatprep.subr.bf16.mxu0 0
    %1077 = vmatpush1.bf16.msra.mxu0 %v1058
    %1078 = vmatprep.subr.bf16.mxu0 0
    %1079 = vmatpush1.bf16.msra.mxu0 %v1057
    %1080 = vmatprep.subr.bf16.mxu0 0
    %1081 = vmatpush1.bf16.msra.mxu0 %v1056
    %1082 = vmatprep.subr.bf16.mxu0 0
    %1083 = vmatpush1.bf16.msra.mxu0 %v1055
    %1084 = vmatprep.subr.bf16.mxu0 0
    %1085 = vmatpush1.bf16.msra.mxu0 %v1054
    %1086 = vmatprep.subr.bf16.mxu0 0
    %1087 = vmatpush2.bf16.msra.mxu0 0
    %1088 = vmatprep.subr.bf16.mxu0 0
    %1089 = vmatpush2.bf16.msra.mxu0 0
    %1090 = vmatprep.subr.bf16.mxu0 0
    %1091 = vmatpush2.bf16.msra.mxu0 0
    %1092 = vmatprep.subr.bf16.mxu0 0
    %1093 = vmatpush2.bf16.msra.mxu0 0
    %1094 = vmatprep.subr.bf16.mxu0 0
    %1095 = vmatpush2.bf16.msra.mxu0 0
    %1096 = vmatprep.subr.bf16.mxu0 0
    %1097 = vmatpush2.bf16.msra.mxu0 0
    %1098 = vmatprep.subr.bf16.mxu0 0
    %1099 = vmatpush2.bf16.msra.mxu0 0
    %1100 = vmatprep.subr.bf16.mxu0 0
    %1101 = vmatpush2.bf16.msra.mxu0 0
    %1102 = vmatprep.mubr.bf16.mxu0 0
    %1103 = vmatmul.mubr.bf16.gmra.mxu0 %v998
    %v1104 = vpop.f32.mrf.mxu0
    %v1105 = vadd.f32 0.0, %v1104
    %v1106 = vpop.f32.mrf.mxu0
    %v1107 = vpop.f32.mrf.mxu0
    %v1108 = vadd.f32 0.0, %v1107
    %v1109 = vpop.f32.mrf.mxu0
    %1110 = vmatprep.mubr.bf16.mxu0 0
    %1111 = vmatmul.mubr.bf16.gmra.mxu0 %v999
    %v1112 = vpop.f32.mrf.mxu0
    %v1113 = vadd.f32 0.0, %v1112
    %v1114 = vpop.f32.mrf.mxu0
    %v1115 = vpop.f32.mrf.mxu0
    %v1116 = vadd.f32 0.0, %v1115
    %v1117 = vpop.f32.mrf.mxu0
    %1118 = vmatprep.mubr.bf16.mxu0 0
    %1119 = vmatmul.mubr.bf16.gmra.mxu0 %v1000
    %v1120 = vpop.f32.mrf.mxu0
    %v1121 = vadd.f32 0.0, %v1120
    %v1122 = vpop.f32.mrf.mxu0
    %v1123 = vpop.f32.mrf.mxu0
    %v1124 = vadd.f32 0.0, %v1123
    %v1125 = vpop.f32.mrf.mxu0
    %1126 = vmatprep.mubr.bf16.mxu0 0
    %1127 = vmatmul.mubr.bf16.gmra.mxu0 %v1001
    %v1128 = vpop.f32.mrf.mxu0
    %v1129 = vadd.f32 0.0, %v1128
    %v1130 = vpop.f32.mrf.mxu0
    %v1131 = vpop.f32.mrf.mxu0
    %v1132 = vadd.f32 0.0, %v1131
    %v1133 = vpop.f32.mrf.mxu0
    %1134 = vmatprep.mubr.bf16.mxu0 0
    %1135 = vmatmul.mubr.bf16.gmra.mxu0 %v1002
    %v1136 = vpop.f32.mrf.mxu0
    %v1137 = vadd.f32 0.0, %v1136
    %v1138 = vpop.f32.mrf.mxu0
    %v1139 = vpop.f32.mrf.mxu0
    %v1140 = vadd.f32 0.0, %v1139
    %v1141 = vpop.f32.mrf.mxu0
    %1142 = vmatprep.mubr.bf16.mxu0 0
    %1143 = vmatmul.mubr.bf16.gmra.mxu0 %v1003
    %v1144 = vpop.f32.mrf.mxu0
    %v1145 = vadd.f32 0.0, %v1144
    %v1146 = vpop.f32.mrf.mxu0
    %v1147 = vpop.f32.mrf.mxu0
    %v1148 = vadd.f32 0.0, %v1147
    %v1149 = vpop.f32.mrf.mxu0
    %1150 = vmatprep.mubr.bf16.mxu0 0
    %1151 = vmatmul.mubr.bf16.gmra.mxu0 %v1004
    %v1152 = vpop.f32.mrf.mxu0
    %v1153 = vadd.f32 0.0, %v1152
    %v1154 = vpop.f32.mrf.mxu0
    %v1155 = vpop.f32.mrf.mxu0
    %v1156 = vadd.f32 0.0, %v1155
    %v1157 = vpop.f32.mrf.mxu0
    %1158 = vmatprep.mubr.bf16.mxu0 0
    %1159 = vmatmul.mubr.bf16.gmra.mxu0 %v1005
    %v1160 = vpop.f32.mrf.mxu0
    %v1161 = vadd.f32 0.0, %v1160
    %v1162 = vpop.f32.mrf.mxu0
    %v1163 = vpop.f32.mrf.mxu0
    %v1164 = vadd.f32 0.0, %v1163
    %v1165 = vpop.f32.mrf.mxu0
    %1166 = vdwg.mxu0
    %v1167 = vadd.f32 %v870, %v1105
    %v1168 = vadd.f32 %v871, %v1108
    %v1169 = vadd.f32 %v872, %v1113
    %v1170 = vadd.f32 %v873, %v1116
    %v1171 = vadd.f32 %v874, %v1121
    %v1172 = vadd.f32 %v875, %v1124
    %v1173 = vadd.f32 %v876, %v1129
    %v1174 = vadd.f32 %v877, %v1132
    %v1175 = vadd.f32 %v878, %v1137
    %v1176 = vadd.f32 %v879, %v1140
    %v1177 = vadd.f32 %v880, %v1145
    %v1178 = vadd.f32 %v881, %v1148
    %v1179 = vadd.f32 %v882, %v1153
    %v1180 = vadd.f32 %v883, %v1156
    %v1181 = vadd.f32 %v884, %v1161
    %v1182 = vadd.f32 %v885, %v1164
    %v1183 = vld [vmem:[%s0 + $0x200] sm:$0xff]
    %v1184 = vld [vmem:[%s0 + $0x208] sm:$0xff]
    %v1185 = vld [vmem:[%s0 + $0x210] sm:$0xff]
    %v1186 = vld [vmem:[%s0 + $0x218] sm:$0xff]
    %v1187 = vld [vmem:[%s0 + $0x220] sm:$0xff]
    %v1188 = vld [vmem:[%s0 + $0x228] sm:$0xff]
    %v1189 = vld [vmem:[%s0 + $0x230] sm:$0xff]
    %v1190 = vld [vmem:[%s0 + $0x238] sm:$0xff]
    %v1191 = vld [vmem:[%s0 + $0x240] sm:$0xff]
    %v1192 = vld [vmem:[%s0 + $0x248] sm:$0xff]
    %v1193 = vld [vmem:[%s0 + $0x250] sm:$0xff]
    %v1194 = vld [vmem:[%s0 + $0x258] sm:$0xff]
    %v1195 = vld [vmem:[%s0 + $0x260] sm:$0xff]
    %v1196 = vld [vmem:[%s0 + $0x268] sm:$0xff]
    %v1197 = vld [vmem:[%s0 + $0x270] sm:$0xff]
    %v1198 = vld [vmem:[%s0 + $0x278] sm:$0xff]
    %1199 = vset.pattern.permute.xlu0 0
    %1200 = vperm.xlu0 %1199, %v1183
    %v1201 = vpop.permute.xlu0 %1200
    %1202 = vset.pattern.permute.xlu0 0
    %1203 = vperm.xlu0 %1202, %v1184
    %v1204 = vpop.permute.xlu0 %1203
    %1205 = vset.pattern.permute.xlu0 0
    %1206 = vperm.xlu0 %1205, %v1185
    %v1207 = vpop.permute.xlu0 %1206
    %1208 = vset.pattern.permute.xlu0 0
    %1209 = vperm.xlu0 %1208, %v1186
    %v1210 = vpop.permute.xlu0 %1209
    %1211 = vset.pattern.permute.xlu0 0
    %1212 = vperm.xlu0 %1211, %v1187
    %v1213 = vpop.permute.xlu0 %1212
    %1214 = vset.pattern.permute.xlu0 0
    %1215 = vperm.xlu0 %1214, %v1188
    %v1216 = vpop.permute.xlu0 %1215
    %1217 = vset.pattern.permute.xlu0 0
    %1218 = vperm.xlu0 %1217, %v1189
    %v1219 = vpop.permute.xlu0 %1218
    %1220 = vset.pattern.permute.xlu0 0
    %1221 = vperm.xlu0 %1220, %v1190
    %v1222 = vpop.permute.xlu0 %1221
    %1223 = vset.pattern.permute.xlu0 0
    %1224 = vperm.xlu0 %1223, %v1191
    %v1225 = vpop.permute.xlu0 %1224
    %1226 = vset.pattern.permute.xlu0 0
    %1227 = vperm.xlu0 %1226, %v1192
    %v1228 = vpop.permute.xlu0 %1227
    %1229 = vset.pattern.permute.xlu0 0
    %1230 = vperm.xlu0 %1229, %v1193
    %v1231 = vpop.permute.xlu0 %1230
    %1232 = vset.pattern.permute.xlu0 0
    %1233 = vperm.xlu0 %1232, %v1194
    %v1234 = vpop.permute.xlu0 %1233
    %1235 = vset.pattern.permute.xlu0 0
    %1236 = vperm.xlu0 %1235, %v1195
    %v1237 = vpop.permute.xlu0 %1236
    %1238 = vset.pattern.permute.xlu0 0
    %1239 = vperm.xlu0 %1238, %v1196
    %v1240 = vpop.permute.xlu0 %1239
    %1241 = vset.pattern.permute.xlu0 0
    %1242 = vperm.xlu0 %1241, %v1197
    %v1243 = vpop.permute.xlu0 %1242
    %1244 = vset.pattern.permute.xlu0 0
    %1245 = vperm.xlu0 %1244, %v1198
    %v1246 = vpop.permute.xlu0 %1245
    %vm1247 = vcmp.eq.s32.totalorder %v1201, %v26
    %vm1248 = vcmp.eq.s32.totalorder %v1204, %v26
    %vm1249 = vcmp.eq.s32.totalorder %v1207, %v26
    %vm1250 = vcmp.eq.s32.totalorder %v1210, %v26
    %vm1251 = vcmp.eq.s32.totalorder %v1213, %v26
    %vm1252 = vcmp.eq.s32.totalorder %v1216, %v26
    %vm1253 = vcmp.eq.s32.totalorder %v1219, %v26
    %vm1254 = vcmp.eq.s32.totalorder %v1222, %v26
    %vm1255 = vcmp.eq.s32.totalorder %v1225, %v26
    %vm1256 = vcmp.eq.s32.totalorder %v1228, %v26
    %vm1257 = vcmp.eq.s32.totalorder %v1231, %v26
    %vm1258 = vcmp.eq.s32.totalorder %v1234, %v26
    %vm1259 = vcmp.eq.s32.totalorder %v1237, %v26
    %vm1260 = vcmp.eq.s32.totalorder %v1240, %v26
    %vm1261 = vcmp.eq.s32.totalorder %v1243, %v26
    %vm1262 = vcmp.eq.s32.totalorder %v1246, %v26
    %v1263 = vsel %vm1247, 1, 0
    %v1264 = vsel %vm1248, 1, 0
    %v1265 = vsel %vm1249, 1, 0
    %v1266 = vsel %vm1250, 1, 0
    %v1267 = vsel %vm1251, 1, 0
    %v1268 = vsel %vm1252, 1, 0
    %v1269 = vsel %vm1253, 1, 0
    %v1270 = vsel %vm1254, 1, 0
    %v1271 = vsel %vm1255, 1, 0
    %v1272 = vsel %vm1256, 1, 0
    %v1273 = vsel %vm1257, 1, 0
    %v1274 = vsel %vm1258, 1, 0
    %v1275 = vsel %vm1259, 1, 0
    %v1276 = vsel %vm1260, 1, 0
    %v1277 = vsel %vm1261, 1, 0
    %v1278 = vsel %vm1262, 1, 0
    %v1279 = vcvt.s32.f32 %v1263
    %v1280 = vcvt.s32.f32 %v1264
    %v1281 = vcvt.s32.f32 %v1265
    %v1282 = vcvt.s32.f32 %v1266
    %v1283 = vcvt.s32.f32 %v1267
    %v1284 = vcvt.s32.f32 %v1268
    %v1285 = vcvt.s32.f32 %v1269
    %v1286 = vcvt.s32.f32 %v1270
    %v1287 = vcvt.s32.f32 %v1271
    %v1288 = vcvt.s32.f32 %v1272
    %v1289 = vcvt.s32.f32 %v1273
    %v1290 = vcvt.s32.f32 %v1274
    %v1291 = vcvt.s32.f32 %v1275
    %v1292 = vcvt.s32.f32 %v1276
    %v1293 = vcvt.s32.f32 %v1277
    %v1294 = vcvt.s32.f32 %v1278
    %v1295 = vpack.c.bf16 %v1280, %v1279
    %v1296 = vpack.c.bf16 %v1282, %v1281
    %v1297 = vpack.c.bf16 %v1284, %v1283
    %v1298 = vpack.c.bf16 %v1286, %v1285
    %v1299 = vpack.c.bf16 %v1288, %v1287
    %v1300 = vpack.c.bf16 %v1290, %v1289
    %v1301 = vpack.c.bf16 %v1292, %v1291
    %v1302 = vpack.c.bf16 %v1294, %v1293
    %v1303 = vld [vmem:[%s1 + $0x100] sm:$0xf]
    %v1304 = vld [vmem:[%s1 + $0x104] sm:$0xf]
    %v1305 = vld [vmem:[%s1 + $0x108] sm:$0xf]
    %v1306 = vld [vmem:[%s1 + $0x10c] sm:$0xf]
    %v1307 = vld [vmem:[%s1 + $0x110] sm:$0xf]
    %v1308 = vld [vmem:[%s1 + $0x114] sm:$0xf]
    %v1309 = vld [vmem:[%s1 + $0x118] sm:$0xf]
    %v1310 = vld [vmem:[%s1 + $0x11c] sm:$0xf]
    %v1311 = vld [vmem:[%s1 + $0x120] sm:$0xf]
    %v1312 = vld [vmem:[%s1 + $0x124] sm:$0xf]
    %v1313 = vld [vmem:[%s1 + $0x128] sm:$0xf]
    %v1314 = vld [vmem:[%s1 + $0x12c] sm:$0xf]
    %v1315 = vld [vmem:[%s1 + $0x130] sm:$0xf]
    %v1316 = vld [vmem:[%s1 + $0x134] sm:$0xf]
    %v1317 = vld [vmem:[%s1 + $0x138] sm:$0xf]
    %v1318 = vld [vmem:[%s1 + $0x13c] sm:$0xf]
    %v1335 = vunpack.c.l.b16 %v1303
    %v1336 = vunpack.c.l.b16 %v1304
    %v1337 = vunpack.c.l.b16 %v1305
    %v1338 = vunpack.c.l.b16 %v1306
    %v1339 = vunpack.c.l.b16 %v1307
    %v1340 = vunpack.c.l.b16 %v1308
    %v1341 = vunpack.c.l.b16 %v1309
    %v1342 = vunpack.c.l.b16 %v1310
    %v1343 = vunpack.c.l.b16 %v1311
    %v1344 = vunpack.c.l.b16 %v1312
    %v1345 = vunpack.c.l.b16 %v1313
    %v1346 = vunpack.c.l.b16 %v1314
    %v1347 = vunpack.c.l.b16 %v1315
    %v1348 = vunpack.c.l.b16 %v1316
    %v1349 = vunpack.c.l.b16 %v1317
    %v1350 = vunpack.c.l.b16 %v1318
    %v1351 = vpack.c.b16 %v1336, %v1335
    %v1352 = vpack.c.b16 %v1338, %v1337
    %v1353 = vpack.c.b16 %v1340, %v1339
    %v1354 = vpack.c.b16 %v1342, %v1341
    %v1355 = vpack.c.b16 %v1344, %v1343
    %v1356 = vpack.c.b16 %v1346, %v1345
    %v1357 = vpack.c.b16 %v1348, %v1347
    %v1358 = vpack.c.b16 %v1350, %v1349
    %1367 = vmatprep.subr.bf16.mxu0 0
    %1368 = vmatpush1.bf16.msra.mxu0 %v1358
    %1369 = vmatprep.subr.bf16.mxu0 0
    %1370 = vmatpush1.bf16.msra.mxu0 %v1357
    %1371 = vmatprep.subr.bf16.mxu0 0
    %1372 = vmatpush1.bf16.msra.mxu0 %v1356
    %1373 = vmatprep.subr.bf16.mxu0 0
    %1374 = vmatpush1.bf16.msra.mxu0 %v1355
    %1375 = vmatprep.subr.bf16.mxu0 0
    %1376 = vmatpush1.bf16.msra.mxu0 %v1354
    %1377 = vmatprep.subr.bf16.mxu0 0
    %1378 = vmatpush1.bf16.msra.mxu0 %v1353
    %1379 = vmatprep.subr.bf16.mxu0 0
    %1380 = vmatpush1.bf16.msra.mxu0 %v1352
    %1381 = vmatprep.subr.bf16.mxu0 0
    %1382 = vmatpush1.bf16.msra.mxu0 %v1351
    %1383 = vmatprep.subr.bf16.mxu0 0
    %1384 = vmatpush2.bf16.msra.mxu0 0
    %1385 = vmatprep.subr.bf16.mxu0 0
    %1386 = vmatpush2.bf16.msra.mxu0 0
    %1387 = vmatprep.subr.bf16.mxu0 0
    %1388 = vmatpush2.bf16.msra.mxu0 0
    %1389 = vmatprep.subr.bf16.mxu0 0
    %1390 = vmatpush2.bf16.msra.mxu0 0
    %1391 = vmatprep.subr.bf16.mxu0 0
    %1392 = vmatpush2.bf16.msra.mxu0 0
    %1393 = vmatprep.subr.bf16.mxu0 0
    %1394 = vmatpush2.bf16.msra.mxu0 0
    %1395 = vmatprep.subr.bf16.mxu0 0
    %1396 = vmatpush2.bf16.msra.mxu0 0
    %1397 = vmatprep.subr.bf16.mxu0 0
    %1398 = vmatpush2.bf16.msra.mxu0 0
    %1399 = vmatprep.mubr.bf16.mxu0 0
    %1400 = vmatmul.mubr.bf16.gmra.mxu0 %v1295
    %v1401 = vpop.f32.mrf.mxu0
    %v1402 = vadd.f32 0.0, %v1401
    %v1403 = vpop.f32.mrf.mxu0
    %v1404 = vpop.f32.mrf.mxu0
    %v1405 = vadd.f32 0.0, %v1404
    %v1406 = vpop.f32.mrf.mxu0
    %1407 = vmatprep.mubr.bf16.mxu0 0
    %1408 = vmatmul.mubr.bf16.gmra.mxu0 %v1296
    %v1409 = vpop.f32.mrf.mxu0
    %v1410 = vadd.f32 0.0, %v1409
    %v1411 = vpop.f32.mrf.mxu0
    %v1412 = vpop.f32.mrf.mxu0
    %v1413 = vadd.f32 0.0, %v1412
    %v1414 = vpop.f32.mrf.mxu0
    %1415 = vmatprep.mubr.bf16.mxu0 0
    %1416 = vmatmul.mubr.bf16.gmra.mxu0 %v1297
    %v1417 = vpop.f32.mrf.mxu0
    %v1418 = vadd.f32 0.0, %v1417
    %v1419 = vpop.f32.mrf.mxu0
    %v1420 = vpop.f32.mrf.mxu0
    %v1421 = vadd.f32 0.0, %v1420
    %v1422 = vpop.f32.mrf.mxu0
    %1423 = vmatprep.mubr.bf16.mxu0 0
    %1424 = vmatmul.mubr.bf16.gmra.mxu0 %v1298
    %v1425 = vpop.f32.mrf.mxu0
    %v1426 = vadd.f32 0.0, %v1425
    %v1427 = vpop.f32.mrf.mxu0
    %v1428 = vpop.f32.mrf.mxu0
    %v1429 = vadd.f32 0.0, %v1428
    %v1430 = vpop.f32.mrf.mxu0
    %1431 = vmatprep.mubr.bf16.mxu0 0
    %1432 = vmatmul.mubr.bf16.gmra.mxu0 %v1299
    %v1433 = vpop.f32.mrf.mxu0
    %v1434 = vadd.f32 0.0, %v1433
    %v1435 = vpop.f32.mrf.mxu0
    %v1436 = vpop.f32.mrf.mxu0
    %v1437 = vadd.f32 0.0, %v1436
    %v1438 = vpop.f32.mrf.mxu0
    %1439 = vmatprep.mubr.bf16.mxu0 0
    %1440 = vmatmul.mubr.bf16.gmra.mxu0 %v1300
    %v1441 = vpop.f32.mrf.mxu0
    %v1442 = vadd.f32 0.0, %v1441
    %v1443 = vpop.f32.mrf.mxu0
    %v1444 = vpop.f32.mrf.mxu0
    %v1445 = vadd.f32 0.0, %v1444
    %v1446 = vpop.f32.mrf.mxu0
    %1447 = vmatprep.mubr.bf16.mxu0 0
    %1448 = vmatmul.mubr.bf16.gmra.mxu0 %v1301
    %v1449 = vpop.f32.mrf.mxu0
    %v1450 = vadd.f32 0.0, %v1449
    %v1451 = vpop.f32.mrf.mxu0
    %v1452 = vpop.f32.mrf.mxu0
    %v1453 = vadd.f32 0.0, %v1452
    %v1454 = vpop.f32.mrf.mxu0
    %1455 = vmatprep.mubr.bf16.mxu0 0
    %1456 = vmatmul.mubr.bf16.gmra.mxu0 %v1302
    %v1457 = vpop.f32.mrf.mxu0
    %v1458 = vadd.f32 0.0, %v1457
    %v1459 = vpop.f32.mrf.mxu0
    %v1460 = vpop.f32.mrf.mxu0
    %v1461 = vadd.f32 0.0, %v1460
    %v1462 = vpop.f32.mrf.mxu0
    %1463 = vdwg.mxu0
    %v1464 = vadd.f32 %v1167, %v1402
    %v1465 = vadd.f32 %v1168, %v1405
    %v1466 = vadd.f32 %v1169, %v1410
    %v1467 = vadd.f32 %v1170, %v1413
    %v1468 = vadd.f32 %v1171, %v1418
    %v1469 = vadd.f32 %v1172, %v1421
    %v1470 = vadd.f32 %v1173, %v1426
    %v1471 = vadd.f32 %v1174, %v1429
    %v1472 = vadd.f32 %v1175, %v1434
    %v1473 = vadd.f32 %v1176, %v1437
    %v1474 = vadd.f32 %v1177, %v1442
    %v1475 = vadd.f32 %v1178, %v1445
    %v1476 = vadd.f32 %v1179, %v1450
    %v1477 = vadd.f32 %v1180, %v1453
    %v1478 = vadd.f32 %v1181, %v1458
    %v1479 = vadd.f32 %v1182, %v1461
    %v1480 = vld [vmem:[%s2] sm:$0x1]
    %v1482 = vlaneseq
    %v1483 = vshrl.u32 %v1482, 7
    %v1484 = vsub.s32 0, %v1483
    %v1485 = vrot.slane %v1480, %v1484
    %v1487 = vadd.f32 %v1464, %v1485
    %v1488 = vadd.f32 %v1465, %v1485
    %v1489 = vadd.f32 %v1466, %v1485
    %v1490 = vadd.f32 %v1467, %v1485
    %v1491 = vadd.f32 %v1468, %v1485
    %v1492 = vadd.f32 %v1469, %v1485
    %v1493 = vadd.f32 %v1470, %v1485
    %v1494 = vadd.f32 %v1471, %v1485
    %v1495 = vadd.f32 %v1472, %v1485
    %v1496 = vadd.f32 %v1473, %v1485
    %v1497 = vadd.f32 %v1474, %v1485
    %v1498 = vadd.f32 %v1475, %v1485
    %v1499 = vadd.f32 %v1476, %v1485
    %v1500 = vadd.f32 %v1477, %v1485
    %v1501 = vadd.f32 %v1478, %v1485
    %v1502 = vadd.f32 %v1479, %v1485
    %v1503 = vmax.f32 %v1487, 0.0
    %v1504 = vmax.f32 %v1488, 0.0
    %v1505 = vmax.f32 %v1489, 0.0
    %v1506 = vmax.f32 %v1490, 0.0
    %v1507 = vmax.f32 %v1491, 0.0
    %v1508 = vmax.f32 %v1492, 0.0
    %v1509 = vmax.f32 %v1493, 0.0
    %v1510 = vmax.f32 %v1494, 0.0
    %v1511 = vmax.f32 %v1495, 0.0
    %v1512 = vmax.f32 %v1496, 0.0
    %v1513 = vmax.f32 %v1497, 0.0
    %v1514 = vmax.f32 %v1498, 0.0
    %v1515 = vmax.f32 %v1499, 0.0
    %v1516 = vmax.f32 %v1500, 0.0
    %v1517 = vmax.f32 %v1501, 0.0
    %v1518 = vmax.f32 %v1502, 0.0
    %v1519 = vld [vmem:[%s3] sm:$0xff]
    %v1520 = vld [vmem:[%s3 + $0x8] sm:$0xff]
    %v1521 = vmul.f32 %v1503, %v1519
    %v1522 = vmul.f32 %v1504, %v1520
    %v1523 = vmul.f32 %v1505, %v1519
    %v1524 = vmul.f32 %v1506, %v1520
    %v1525 = vmul.f32 %v1507, %v1519
    %v1526 = vmul.f32 %v1508, %v1520
    %v1527 = vmul.f32 %v1509, %v1519
    %v1528 = vmul.f32 %v1510, %v1520
    %v1529 = vmul.f32 %v1511, %v1519
    %v1530 = vmul.f32 %v1512, %v1520
    %v1531 = vmul.f32 %v1513, %v1519
    %v1532 = vmul.f32 %v1514, %v1520
    %v1533 = vmul.f32 %v1515, %v1519
    %v1534 = vmul.f32 %v1516, %v1520
    %v1535 = vmul.f32 %v1517, %v1519
    %v1536 = vmul.f32 %v1518, %v1520
    %v1537 = vmax.f32 %v1521, %v1522
    %v1538 = vrot.slane %v1537, 4
    %v1539 = vmax.f32 %v1537, %v1538
    %v1540 = vrot.slane %v1539, 2
    %v1541 = vmax.f32 %v1539, %v1540
    %v1542 = vrot.slane %v1541, 1
    %v1543 = vmax.f32 %v1541, %v1542
    %v1544 = vmax.f32 %v1523, %v1524
    %v1545 = vrot.slane %v1544, 4
    %v1546 = vmax.f32 %v1544, %v1545
    %v1547 = vrot.slane %v1546, 2
    %v1548 = vmax.f32 %v1546, %v1547
    %v1549 = vrot.slane %v1548, 1
    %v1550 = vmax.f32 %v1548, %v1549
    %v1551 = vmax.f32 %v1525, %v1526
    %v1552 = vrot.slane %v1551, 4
    %v1553 = vmax.f32 %v1551, %v1552
    %v1554 = vrot.slane %v1553, 2
    %v1555 = vmax.f32 %v1553, %v1554
    %v1556 = vrot.slane %v1555, 1
    %v1557 = vmax.f32 %v1555, %v1556
    %v1558 = vmax.f32 %v1527, %v1528
    %v1559 = vrot.slane %v1558, 4
    %v1560 = vmax.f32 %v1558, %v1559
    %v1561 = vrot.slane %v1560, 2
    %v1562 = vmax.f32 %v1560, %v1561
    %v1563 = vrot.slane %v1562, 1
    %v1564 = vmax.f32 %v1562, %v1563
    %v1565 = vmax.f32 %v1529, %v1530
    %v1566 = vrot.slane %v1565, 4
    %v1567 = vmax.f32 %v1565, %v1566
    %v1568 = vrot.slane %v1567, 2
    %v1569 = vmax.f32 %v1567, %v1568
    %v1570 = vrot.slane %v1569, 1
    %v1571 = vmax.f32 %v1569, %v1570
    %v1572 = vmax.f32 %v1531, %v1532
    %v1573 = vrot.slane %v1572, 4
    %v1574 = vmax.f32 %v1572, %v1573
    %v1575 = vrot.slane %v1574, 2
    %v1576 = vmax.f32 %v1574, %v1575
    %v1577 = vrot.slane %v1576, 1
    %v1578 = vmax.f32 %v1576, %v1577
    %v1579 = vmax.f32 %v1533, %v1534
    %v1580 = vrot.slane %v1579, 4
    %v1581 = vmax.f32 %v1579, %v1580
    %v1582 = vrot.slane %v1581, 2
    %v1583 = vmax.f32 %v1581, %v1582
    %v1584 = vrot.slane %v1583, 1
    %v1585 = vmax.f32 %v1583, %v1584
    %v1586 = vmax.f32 %v1535, %v1536
    %v1587 = vrot.slane %v1586, 4
    %v1588 = vmax.f32 %v1586, %v1587
    %v1589 = vrot.slane %v1588, 2
    %v1590 = vmax.f32 %v1588, %v1589
    %v1591 = vrot.slane %v1590, 1
    %v1592 = vmax.f32 %v1590, %v1591
    %v1593 = vld [vmem:[%s4] sm:$0xff]
    %v1594 = vld [vmem:[%s4 + $0x8] sm:$0xff]
    %v1595 = vld [vmem:[%s4 + $0x10] sm:$0xff]
    %v1596 = vld [vmem:[%s4 + $0x18] sm:$0xff]
    %v1597 = vld [vmem:[%s5] sm:$0x1]
    %v1599 = vlaneseq
    %v1600 = vshrl.u32 %v1599, 7
    %v1601 = vsub.s32 0, %v1600
    %v1602 = vrot.slane %v1597, %v1601
    %vm1612 = vcmask 1041409
    %v1613 = vsel %vm1612, %v1550, %v1543
    %vm1614 = vcmask 1042434
    %v1615 = vsel %vm1614, %v1557, %v1613
    %vm1616 = vcmask 1043459
    %v1617 = vsel %vm1616, %v1564, %v1615
    %vm1618 = vcmask 1044484
    %v1619 = vsel %vm1618, %v1571, %v1617
    %vm1620 = vcmask 1045509
    %v1621 = vsel %vm1620, %v1578, %v1619
    %vm1622 = vcmask 1046534
    %v1623 = vsel %vm1622, %v1585, %v1621
    %vm1624 = vcmask 1047559
    %v1625 = vsel %vm1624, %v1592, %v1623
    %vm1626 = vcmask 261120
    %v1627 = vsel %vm1626, %v1625, 0
    %1629 = vmatprep.subr.mxu0 0.0
    %1630 = vmatpush1.msra.mxu0 0.0
    %1631 = vmatprep.subr.mxu0 0.0
    %1632 = vmatpush1.msra.mxu0 0.0
    %1633 = vmatprep.subr.mxu0 0.0
    %1634 = vmatpush1.msra.mxu0 0.0
    %1635 = vmatprep.subr.mxu0 0.0
    %1636 = vmatpush1.msra.mxu0 0.0
    %1637 = vmatprep.subr.mxu0 0.0
    %1638 = vmatpush1.msra.mxu0 0.0
    %1639 = vmatprep.subr.mxu0 0.0
    %1640 = vmatpush1.msra.mxu0 0.0
    %1641 = vmatprep.subr.mxu0 0.0
    %1642 = vmatpush1.msra.mxu0 0.0
    %1643 = vmatprep.subr.mxu0 0.0
    %1644 = vmatpush1.msra.mxu0 0.0
    %1645 = vmatprep.subr.mxu0 0.0
    %1646 = vmatpush1.msra.mxu0 0.0
    %1647 = vmatprep.subr.mxu0 0.0
    %1648 = vmatpush1.msra.mxu0 0.0
    %1649 = vmatprep.subr.mxu0 0.0
    %1650 = vmatpush1.msra.mxu0 0.0
    %1651 = vmatprep.subr.mxu0 0.0
    %1652 = vmatpush1.msra.mxu0 0.0
    %1653 = vmatprep.subr.mxu0 0.0
    %1654 = vmatpush1.msra.mxu0 %v1596
    %1655 = vmatprep.subr.mxu0 0.0
    %1656 = vmatpush1.msra.mxu0 %v1595
    %1657 = vmatprep.subr.mxu0 0.0
    %1658 = vmatpush1.msra.mxu0 %v1594
    %1659 = vmatprep.subr.mxu0 0.0
    %1660 = vmatpush1.msra.mxu0 %v1593
    %1661 = vmatprep.subr.mxu0 0.0
    %1662 = vmatpush2.msra.mxu0 0.0
    %1663 = vmatprep.subr.mxu0 0.0
    %1664 = vmatpush2.msra.mxu0 0.0
    %1665 = vmatprep.subr.mxu0 0.0
    %1666 = vmatpush2.msra.mxu0 0.0
    %1667 = vmatprep.subr.mxu0 0.0
    %1668 = vmatpush2.msra.mxu0 0.0
    %1669 = vmatprep.subr.mxu0 0.0
    %1670 = vmatpush2.msra.mxu0 0.0
    %1671 = vmatprep.subr.mxu0 0.0
    %1672 = vmatpush2.msra.mxu0 0.0
    %1673 = vmatprep.subr.mxu0 0.0
    %1674 = vmatpush2.msra.mxu0 0.0
    %1675 = vmatprep.subr.mxu0 0.0
    %1676 = vmatpush2.msra.mxu0 0.0
    %1677 = vmatprep.subr.mxu0 0.0
    %1678 = vmatpush2.msra.mxu0 0.0
    %1679 = vmatprep.subr.mxu0 0.0
    %1680 = vmatpush2.msra.mxu0 0.0
    %1681 = vmatprep.subr.mxu0 0.0
    %1682 = vmatpush2.msra.mxu0 0.0
    %1683 = vmatprep.subr.mxu0 0.0
    %1684 = vmatpush2.msra.mxu0 0.0
    %1685 = vmatprep.subr.mxu0 0.0
    %1686 = vmatpush2.msra.mxu0 0.0
    %1687 = vmatprep.subr.mxu0 0.0
    %1688 = vmatpush2.msra.mxu0 0.0
    %1689 = vmatprep.subr.mxu0 0.0
    %1690 = vmatpush2.msra.mxu0 0.0
    %1691 = vmatprep.subr.mxu0 0.0
    %1692 = vmatpush2.msra.mxu0 0.0
    %1693 = vmatprep.mubr.f32.mxu0 0.0
    %1694 = vmatmul.mubr.f32.gmra.mxu0 %v1627
    %v1695 = vpop.f32.mrf.mxu0
    %v1696 = vadd.f32 %v1602, %v1695
    %v1697 = vpop.f32.mrf.mxu0
    %1698 = vdwg.mxu0
    %1699 = vst [vmem:[#allocation2] sm:$0xff] %v1696
    // Predicated region
    $region26: #{_forward_slab.1} parent=1 // pred_check
      _
    $region27: #{_forward_slab.1} parent=1 // pred_check_branch
      %1701 = sbr.rel (0) target = $region29
    $region28: #{_forward_slab.1} parent=1 // pred_region
      %s1703 = ssub.s32 128, 128
      %1704 = vsyncadd [#allocation3], %s1703
      %s1706 = sshll.u32 [#allocation2], 4
      %s1707 = int_to_ptr.vmem [resolvable:$true] %s1706
      %1709 = dma.vmem_to_hbm [thread:$0]  %s1707, 128, %s6, [#allocation3]
    $region29: #{_forward_slab.1} parent=1 // pred_fallthru
      _
    // Predicated region
    $region30: #{_forward_slab.1} parent=1 // pred_check
      _
    $region31: #{_forward_slab.1} parent=1 // pred_check_branch
      %1711 = sbr.rel (0) target = $region33
    $region32: #{_forward_slab.1} parent=1 // pred_region
      %1712 = dma.done [#allocation3], 128
    $region33: #{_forward_slab.1} parent=1 // pred_fallthru
      _
    %1713 = vsyncpa [#allocation3], 1

</llo_original>
